<compile_context>
chip_gen: v7x
topology: tpu7x:2x2x1
jax: 0.10.0
libtpu: 0.0.40
codegen_flags: <defaults>
</compile_context>

<pallas_src>
import functools

import jax
import jax.numpy as jnp
from jax.experimental import pallas as pl
from jax.experimental.pallas import tpu as pltpu


def _elr_kernel(
    index_ref,      # SMEM (B,) int32         [scalar prefetch]
    outputs_ref,    # VMEM (TB, CLS)          [logits tile]
    ema_in_ref,     # ANY  (NUM, CLS)         [full EMA table, HBM]
    ema_out_ref,    # ANY  (NUM, CLS)         [same buffer, aliased output]
    partial_ref,    # VMEM (1, 128)           [lane-dense per-tile partial loss]
    rows_buf,       # VMEM (TB, CLS) scratch  [gathered / updated EMA rows]
    gather_sem,     # DMA sems (TB,)
    scatter_sem,    # DMA sems (TB,)
    *, beta, lamb, tb, batch,
):
    i = pl.program_id(0)

    # ---- gather: DMA the TB EMA rows this tile touches into VMEM --------------
    gathers = []
    for r in range(tb):
        row = index_ref[i * tb + r]
        cp = pltpu.make_async_copy(
            ema_in_ref.at[pl.ds(row, 1), :],
            rows_buf.at[pl.ds(r, 1), :],
            gather_sem.at[r],
        )
        cp.start()
        gathers.append(cp)

    # ---- softmax / clamp / normalization (f32 in-kernel, overlaps gather DMA) -
    logits = outputs_ref[...].astype(jnp.float32)
    m = jnp.max(logits, axis=1, keepdims=True)
    e = jnp.exp(logits - m)
    y_pred = e * pl.reciprocal(jnp.sum(e, axis=1, keepdims=True), approx=True)
    y_pred = jnp.clip(y_pred, 1e-4, 1.0 - 1e-4)
    # y_pred.detach() has identical values in the forward pass.
    y_norm = y_pred * pl.reciprocal(
        jnp.sum(y_pred, axis=1, keepdims=True), approx=True)

    for cp in gathers:
        cp.wait()

    # ---- EMA update: ema[idx] = beta * ema[idx] + (1 - beta) * y_norm ---------
    old_rows = rows_buf[...].astype(jnp.float32)
    new_rows = beta * old_rows + (1.0 - beta) * y_norm
    rows_buf[...] = new_rows.astype(rows_buf.dtype)

    # ---- scatter: DMA updated rows back into the aliased table (in place) -----
    scatters = []
    for r in range(tb):
        row = index_ref[i * tb + r]
        cp = pltpu.make_async_copy(
            rows_buf.at[pl.ds(r, 1), :],
            ema_out_ref.at[pl.ds(row, 1), :],
            scatter_sem.at[r],
        )
        cp.start()
        scatters.append(cp)

    # ---- per-tile partial loss (overlaps the scatter DMAs) --------------------
    # elr_reg = mean(log(1 - sum(ema[index] * y_pred, dim=1))); fold lamb / B here
    # so the wrapper only has to sum the per-tile partials.
    dot = jnp.sum(new_rows * y_pred, axis=1, keepdims=True)          # (TB, 1)
    tile_sum = jnp.sum(jnp.log(1.0 - dot), axis=0, keepdims=True)    # (1, 1)
    partial_ref[...] = jnp.broadcast_to(tile_sum * (lamb / batch), (1, 128))

    for cp in scatters:
        cp.wait()


def _pick_batch_tile(b):
    # Largest multiple-of-8 tile <= 128 that divides the batch: keeps blocks
    # (8,128)-friendly and small enough to double-buffer within v7x's 64 MiB VMEM
    # while amortizing the per-step overhead on v5e/v6e.
    for cand in (128, 64, 32, 16, 8):
        if b % cand == 0:
            return cand
    return b


def elr_loss(index, outputs, ema, *, beta, lamb):
    """Functional ELR loss.  Returns (final_loss, updated_ema)."""
    B, CLS = outputs.shape
    NUM, CLS2 = ema.shape
    assert CLS == CLS2

    tb = _pick_batch_tile(B)
    num_tiles = B // tb

    kernel = functools.partial(
        _elr_kernel, beta=float(beta), lamb=float(lamb), tb=tb, batch=B)

    grid_spec = pltpu.PrefetchScalarGridSpec(
        num_scalar_prefetch=1,                         # `index` lands in SMEM
        grid=(num_tiles,),
        in_specs=[
            pl.BlockSpec((tb, CLS), lambda i, idx: (i, 0)),   # logits tile
            pl.BlockSpec(memory_space=pl.ANY),                # full EMA table (HBM)
        ],
        out_specs=(
            pl.BlockSpec(memory_space=pl.ANY),                # aliased EMA table
            pl.BlockSpec((1, 128), lambda i, idx: (i, 0)),    # lane-dense partials
        ),
        scratch_shapes=[
            pltpu.VMEM((tb, CLS), ema.dtype),
            pltpu.SemaphoreType.DMA((tb,)),
            pltpu.SemaphoreType.DMA((tb,)),
        ],
    )

    ema_new, partials = pl.pallas_call(
        kernel,
        grid_spec=grid_spec,
        out_shape=(
            jax.ShapeDtypeStruct((NUM, CLS), ema.dtype),
            jax.ShapeDtypeStruct((num_tiles, 128), jnp.float32),
        ),
        # Call args are (index, outputs, ema); scalar-prefetch args count, so `ema`
        # is input 2 -> alias onto output 0 (the updated table), updated in place.
        input_output_aliases={2: 0},
        compiler_params=pltpu.CompilerParams(
            dimension_semantics=("parallel",),   # shard batch tiles across TCs (v7x)
            vmem_limit_bytes=32 * 1024 * 1024,
        ),
    )(index.astype(jnp.int32), outputs, ema)

    # Partial sums already carry the lamb / B scaling.
    loss = jnp.sum(partials[:, 0])
    return loss, ema_new


def _elr_loss_ref(index, outputs, ema, *, beta, lamb):
    """Pure-JAX reference mirroring the PyTorch forward."""
    y_pred = jax.nn.softmax(outputs.astype(jnp.float32), axis=1)
    y_pred = jnp.clip(y_pred, 1e-4, 1.0 - 1e-4)
    y_norm = y_pred / jnp.sum(y_pred, axis=1, keepdims=True)
    new_rows = beta * ema[index] + (1.0 - beta) * y_norm
    ema_new = ema.at[index].set(new_rows)
    elr_reg = jnp.mean(jnp.log(1.0 - jnp.sum(ema_new[index] * y_pred, axis=1)))
    return lamb * elr_reg, ema_new


if __name__ == "__main__":
    # Small deterministic shapes consistent with the module.
    NUM, CLS, B = 64, 16, 8
    beta, lamb = 0.6, 3.0

    key = jax.random.PRNGKey(0)
    k_out, k_idx = jax.random.split(key, 2)

    outputs = jax.random.normal(k_out, (B, CLS), dtype=jnp.float32)
    index = jax.random.permutation(k_idx, NUM)[:B].astype(jnp.int32)

    # Donate the EMA table so the aliased kernel output truly updates it in place.
    elr_fn = jax.jit(elr_loss, static_argnames=("beta", "lamb"), donate_argnums=(2,))

    # Module __init__ starts the EMA at zeros; run two steps so the second step
    # exercises a non-trivial EMA.
    ema = jnp.zeros((NUM, CLS), dtype=jnp.float32)
    loss1, ema = elr_fn(index, outputs, ema, beta=beta, lamb=lamb)
    loss2, ema = elr_fn(index, outputs, ema, beta=beta, lamb=lamb)
    jax.block_until_ready((loss1, loss2, ema))

    # Sanity check vs. pure-JAX reference.  Tolerances are loose because the kernel
    # uses the approximate EUP reciprocal (pl.reciprocal(..., approx=True)).
    ref_ema = jnp.zeros((NUM, CLS), dtype=jnp.float32)
    rl1, ref_ema = _elr_loss_ref(index, outputs, ref_ema, beta=beta, lamb=lamb)
    rl2, ref_ema = _elr_loss_ref(index, outputs, ref_ema, beta=beta, lamb=lamb)

    assert jnp.allclose(loss1, rl1, atol=1e-2, rtol=1e-2), (loss1, rl1)
    assert jnp.allclose(loss2, rl2, atol=1e-2, rtol=1e-2), (loss2, rl2)
    assert jnp.allclose(ema, ref_ema, atol=1e-2, rtol=1e-2)

    print("KERNEL_OK")
</pallas_src>

<mosaic_0001>
module attributes {stable_mosaic.version = 11 : i64} {
  func.func @_elr_kernel(%arg0: i32, %arg1: memref<8xi32, #tpu.memory_space<smem>>, %arg2: memref<8x16xf32, #tpu.memory_space<vmem>>, %arg3: memref<64x16xf32, #tpu.memory_space<any>>, %arg4: memref<64x16xf32, #tpu.memory_space<any>>, %arg5: memref<1x128xf32, #tpu.memory_space<vmem>>, %arg6: memref<8x16xf32, #tpu.memory_space<vmem>>, %arg7: memref<8x!tpu.dma_semaphore, #tpu.memory_space<semaphore_mem>>, %arg8: memref<8x!tpu.dma_semaphore, #tpu.memory_space<semaphore_mem>>) attributes {dimension_semantics = [#tpu.dimension_semantics<parallel>], iteration_bounds = array<i64: 1>, scalar_prefetch = 1 : i64, scratch_operands = 3 : i64, tpu.core_type = #tpu.core_type<tc>, window_params = [{transform_indices = @transform_0, window_bounds = array<i64: 8, 16>}, {}, {}, {transform_indices = @transform_3, window_bounds = array<i64: 1, 128>}]} {
    %c8_i32 = arith.constant 8 : i32
    %0 = arith.muli %arg0, %c8_i32 : i32
    %c0_i32 = arith.constant 0 : i32
    %1 = arith.addi %0, %c0_i32 : i32
    %2 = arith.index_cast %1 : i32 to index
    %3 = memref.load %arg1[%2] : memref<8xi32, #tpu.memory_space<smem>>
    %c0_i32_0 = arith.constant 0 : i32
    %c0_i32_1 = arith.constant 0 : i32
    %4 = tpu.memref_slice %arg3[%3, %c0_i32_1] : memref<64x16xf32, #tpu.memory_space<any>> -> memref<1x16xf32, #tpu.memory_space<any>>
    %c0_i32_2 = arith.constant 0 : i32
    %c0_i32_3 = arith.constant 0 : i32
    %5 = tpu.memref_slice %arg6[%c0_i32_2, %c0_i32_3] : memref<8x16xf32, #tpu.memory_space<vmem>> -> memref<1x16xf32, #tpu.memory_space<vmem>>
    %6 = tpu.memref_slice %arg7[%c0_i32_0] : memref<8x!tpu.dma_semaphore, #tpu.memory_space<semaphore_mem>> -> memref<1x!tpu.dma_semaphore, #tpu.memory_space<semaphore_mem>>
    %7 = tpu.memref_squeeze %6 : memref<1x!tpu.dma_semaphore, #tpu.memory_space<semaphore_mem>> -> memref<!tpu.dma_semaphore, #tpu.memory_space<semaphore_mem>>
    tpu.enqueue_dma source(%4 : memref<1x16xf32, #tpu.memory_space<any>>) target(%5 : memref<1x16xf32, #tpu.memory_space<vmem>>) target_semaphore(%7 : memref<!tpu.dma_semaphore, #tpu.memory_space<semaphore_mem>>)
    %c8_i32_4 = arith.constant 8 : i32
    %8 = arith.muli %arg0, %c8_i32_4 : i32
    %c1_i32 = arith.constant 1 : i32
    %9 = arith.addi %8, %c1_i32 : i32
    %10 = arith.index_cast %9 : i32 to index
    %11 = memref.load %arg1[%10] : memref<8xi32, #tpu.memory_space<smem>>
    %c1_i32_5 = arith.constant 1 : i32
    %c0_i32_6 = arith.constant 0 : i32
    %12 = tpu.memref_slice %arg3[%11, %c0_i32_6] : memref<64x16xf32, #tpu.memory_space<any>> -> memref<1x16xf32, #tpu.memory_space<any>>
    %c1_i32_7 = arith.constant 1 : i32
    %c0_i32_8 = arith.constant 0 : i32
    %13 = tpu.memref_slice %arg6[%c1_i32_7, %c0_i32_8] : memref<8x16xf32, #tpu.memory_space<vmem>> -> memref<1x16xf32, #tpu.memory_space<vmem>>
    %14 = tpu.memref_slice %arg7[%c1_i32_5] : memref<8x!tpu.dma_semaphore, #tpu.memory_space<semaphore_mem>> -> memref<1x!tpu.dma_semaphore, #tpu.memory_space<semaphore_mem>>
    %15 = tpu.memref_squeeze %14 : memref<1x!tpu.dma_semaphore, #tpu.memory_space<semaphore_mem>> -> memref<!tpu.dma_semaphore, #tpu.memory_space<semaphore_mem>>
    tpu.enqueue_dma source(%12 : memref<1x16xf32, #tpu.memory_space<any>>) target(%13 : memref<1x16xf32, #tpu.memory_space<vmem>>) target_semaphore(%15 : memref<!tpu.dma_semaphore, #tpu.memory_space<semaphore_mem>>)
    %c8_i32_9 = arith.constant 8 : i32
    %16 = arith.muli %arg0, %c8_i32_9 : i32
    %c2_i32 = arith.constant 2 : i32
    %17 = arith.addi %16, %c2_i32 : i32
    %18 = arith.index_cast %17 : i32 to index
    %19 = memref.load %arg1[%18] : memref<8xi32, #tpu.memory_space<smem>>
    %c2_i32_10 = arith.constant 2 : i32
    %c0_i32_11 = arith.constant 0 : i32
    %20 = tpu.memref_slice %arg3[%19, %c0_i32_11] : memref<64x16xf32, #tpu.memory_space<any>> -> memref<1x16xf32, #tpu.memory_space<any>>
    %c2_i32_12 = arith.constant 2 : i32
    %c0_i32_13 = arith.constant 0 : i32
    %21 = tpu.memref_slice %arg6[%c2_i32_12, %c0_i32_13] : memref<8x16xf32, #tpu.memory_space<vmem>> -> memref<1x16xf32, #tpu.memory_space<vmem>>
    %22 = tpu.memref_slice %arg7[%c2_i32_10] : memref<8x!tpu.dma_semaphore, #tpu.memory_space<semaphore_mem>> -> memref<1x!tpu.dma_semaphore, #tpu.memory_space<semaphore_mem>>
    %23 = tpu.memref_squeeze %22 : memref<1x!tpu.dma_semaphore, #tpu.memory_space<semaphore_mem>> -> memref<!tpu.dma_semaphore, #tpu.memory_space<semaphore_mem>>
    tpu.enqueue_dma source(%20 : memref<1x16xf32, #tpu.memory_space<any>>) target(%21 : memref<1x16xf32, #tpu.memory_space<vmem>>) target_semaphore(%23 : memref<!tpu.dma_semaphore, #tpu.memory_space<semaphore_mem>>)
    %c8_i32_14 = arith.constant 8 : i32
    %24 = arith.muli %arg0, %c8_i32_14 : i32
    %c3_i32 = arith.constant 3 : i32
    %25 = arith.addi %24, %c3_i32 : i32
    %26 = arith.index_cast %25 : i32 to index
    %27 = memref.load %arg1[%26] : memref<8xi32, #tpu.memory_space<smem>>
    %c3_i32_15 = arith.constant 3 : i32
    %c0_i32_16 = arith.constant 0 : i32
    %28 = tpu.memref_slice %arg3[%27, %c0_i32_16] : memref<64x16xf32, #tpu.memory_space<any>> -> memref<1x16xf32, #tpu.memory_space<any>>
    %c3_i32_17 = arith.constant 3 : i32
    %c0_i32_18 = arith.constant 0 : i32
    %29 = tpu.memref_slice %arg6[%c3_i32_17, %c0_i32_18] : memref<8x16xf32, #tpu.memory_space<vmem>> -> memref<1x16xf32, #tpu.memory_space<vmem>>
    %30 = tpu.memref_slice %arg7[%c3_i32_15] : memref<8x!tpu.dma_semaphore, #tpu.memory_space<semaphore_mem>> -> memref<1x!tpu.dma_semaphore, #tpu.memory_space<semaphore_mem>>
    %31 = tpu.memref_squeeze %30 : memref<1x!tpu.dma_semaphore, #tpu.memory_space<semaphore_mem>> -> memref<!tpu.dma_semaphore, #tpu.memory_space<semaphore_mem>>
    tpu.enqueue_dma source(%28 : memref<1x16xf32, #tpu.memory_space<any>>) target(%29 : memref<1x16xf32, #tpu.memory_space<vmem>>) target_semaphore(%31 : memref<!tpu.dma_semaphore, #tpu.memory_space<semaphore_mem>>)
    %c8_i32_19 = arith.constant 8 : i32
    %32 = arith.muli %arg0, %c8_i32_19 : i32
    %c4_i32 = arith.constant 4 : i32
    %33 = arith.addi %32, %c4_i32 : i32
    %34 = arith.index_cast %33 : i32 to index
    %35 = memref.load %arg1[%34] : memref<8xi32, #tpu.memory_space<smem>>
    %c4_i32_20 = arith.constant 4 : i32
    %c0_i32_21 = arith.constant 0 : i32
    %36 = tpu.memref_slice %arg3[%35, %c0_i32_21] : memref<64x16xf32, #tpu.memory_space<any>> -> memref<1x16xf32, #tpu.memory_space<any>>
    %c4_i32_22 = arith.constant 4 : i32
    %c0_i32_23 = arith.constant 0 : i32
    %37 = tpu.memref_slice %arg6[%c4_i32_22, %c0_i32_23] : memref<8x16xf32, #tpu.memory_space<vmem>> -> memref<1x16xf32, #tpu.memory_space<vmem>>
    %38 = tpu.memref_slice %arg7[%c4_i32_20] : memref<8x!tpu.dma_semaphore, #tpu.memory_space<semaphore_mem>> -> memref<1x!tpu.dma_semaphore, #tpu.memory_space<semaphore_mem>>
    %39 = tpu.memref_squeeze %38 : memref<1x!tpu.dma_semaphore, #tpu.memory_space<semaphore_mem>> -> memref<!tpu.dma_semaphore, #tpu.memory_space<semaphore_mem>>
    tpu.enqueue_dma source(%36 : memref<1x16xf32, #tpu.memory_space<any>>) target(%37 : memref<1x16xf32, #tpu.memory_space<vmem>>) target_semaphore(%39 : memref<!tpu.dma_semaphore, #tpu.memory_space<semaphore_mem>>)
    %c8_i32_24 = arith.constant 8 : i32
    %40 = arith.muli %arg0, %c8_i32_24 : i32
    %c5_i32 = arith.constant 5 : i32
    %41 = arith.addi %40, %c5_i32 : i32
    %42 = arith.index_cast %41 : i32 to index
    %43 = memref.load %arg1[%42] : memref<8xi32, #tpu.memory_space<smem>>
    %c5_i32_25 = arith.constant 5 : i32
    %c0_i32_26 = arith.constant 0 : i32
    %44 = tpu.memref_slice %arg3[%43, %c0_i32_26] : memref<64x16xf32, #tpu.memory_space<any>> -> memref<1x16xf32, #tpu.memory_space<any>>
    %c5_i32_27 = arith.constant 5 : i32
    %c0_i32_28 = arith.constant 0 : i32
    %45 = tpu.memref_slice %arg6[%c5_i32_27, %c0_i32_28] : memref<8x16xf32, #tpu.memory_space<vmem>> -> memref<1x16xf32, #tpu.memory_space<vmem>>
    %46 = tpu.memref_slice %arg7[%c5_i32_25] : memref<8x!tpu.dma_semaphore, #tpu.memory_space<semaphore_mem>> -> memref<1x!tpu.dma_semaphore, #tpu.memory_space<semaphore_mem>>
    %47 = tpu.memref_squeeze %46 : memref<1x!tpu.dma_semaphore, #tpu.memory_space<semaphore_mem>> -> memref<!tpu.dma_semaphore, #tpu.memory_space<semaphore_mem>>
    tpu.enqueue_dma source(%44 : memref<1x16xf32, #tpu.memory_space<any>>) target(%45 : memref<1x16xf32, #tpu.memory_space<vmem>>) target_semaphore(%47 : memref<!tpu.dma_semaphore, #tpu.memory_space<semaphore_mem>>)
    %c8_i32_29 = arith.constant 8 : i32
    %48 = arith.muli %arg0, %c8_i32_29 : i32
    %c6_i32 = arith.constant 6 : i32
    %49 = arith.addi %48, %c6_i32 : i32
    %50 = arith.index_cast %49 : i32 to index
    %51 = memref.load %arg1[%50] : memref<8xi32, #tpu.memory_space<smem>>
    %c6_i32_30 = arith.constant 6 : i32
    %c0_i32_31 = arith.constant 0 : i32
    %52 = tpu.memref_slice %arg3[%51, %c0_i32_31] : memref<64x16xf32, #tpu.memory_space<any>> -> memref<1x16xf32, #tpu.memory_space<any>>
    %c6_i32_32 = arith.constant 6 : i32
    %c0_i32_33 = arith.constant 0 : i32
    %53 = tpu.memref_slice %arg6[%c6_i32_32, %c0_i32_33] : memref<8x16xf32, #tpu.memory_space<vmem>> -> memref<1x16xf32, #tpu.memory_space<vmem>>
    %54 = tpu.memref_slice %arg7[%c6_i32_30] : memref<8x!tpu.dma_semaphore, #tpu.memory_space<semaphore_mem>> -> memref<1x!tpu.dma_semaphore, #tpu.memory_space<semaphore_mem>>
    %55 = tpu.memref_squeeze %54 : memref<1x!tpu.dma_semaphore, #tpu.memory_space<semaphore_mem>> -> memref<!tpu.dma_semaphore, #tpu.memory_space<semaphore_mem>>
    tpu.enqueue_dma source(%52 : memref<1x16xf32, #tpu.memory_space<any>>) target(%53 : memref<1x16xf32, #tpu.memory_space<vmem>>) target_semaphore(%55 : memref<!tpu.dma_semaphore, #tpu.memory_space<semaphore_mem>>)
    %c8_i32_34 = arith.constant 8 : i32
    %56 = arith.muli %arg0, %c8_i32_34 : i32
    %c7_i32 = arith.constant 7 : i32
    %57 = arith.addi %56, %c7_i32 : i32
    %58 = arith.index_cast %57 : i32 to index
    %59 = memref.load %arg1[%58] : memref<8xi32, #tpu.memory_space<smem>>
    %c7_i32_35 = arith.constant 7 : i32
    %c0_i32_36 = arith.constant 0 : i32
    %60 = tpu.memref_slice %arg3[%59, %c0_i32_36] : memref<64x16xf32, #tpu.memory_space<any>> -> memref<1x16xf32, #tpu.memory_space<any>>
    %c7_i32_37 = arith.constant 7 : i32
    %c0_i32_38 = arith.constant 0 : i32
    %61 = tpu.memref_slice %arg6[%c7_i32_37, %c0_i32_38] : memref<8x16xf32, #tpu.memory_space<vmem>> -> memref<1x16xf32, #tpu.memory_space<vmem>>
    %62 = tpu.memref_slice %arg7[%c7_i32_35] : memref<8x!tpu.dma_semaphore, #tpu.memory_space<semaphore_mem>> -> memref<1x!tpu.dma_semaphore, #tpu.memory_space<semaphore_mem>>
    %63 = tpu.memref_squeeze %62 : memref<1x!tpu.dma_semaphore, #tpu.memory_space<semaphore_mem>> -> memref<!tpu.dma_semaphore, #tpu.memory_space<semaphore_mem>>
    tpu.enqueue_dma source(%60 : memref<1x16xf32, #tpu.memory_space<any>>) target(%61 : memref<1x16xf32, #tpu.memory_space<vmem>>) target_semaphore(%63 : memref<!tpu.dma_semaphore, #tpu.memory_space<semaphore_mem>>)
    %c0 = arith.constant 0 : index
    %c0_39 = arith.constant 0 : index
    %64 = vector.load %arg2[%c0, %c0_39] : memref<8x16xf32, #tpu.memory_space<vmem>>, vector<8x16xf32>
    %cst = arith.constant dense<0xFF800000> : vector<8xf32>
    %65 = vector.multi_reduction <maximumf>, %64, %cst [1] : vector<8x16xf32> to vector<8xf32>
    %66 = vector.shape_cast %65 : vector<8xf32> to vector<8x1xf32>
    %67 = vector.broadcast %66 : vector<8x1xf32> to vector<8x16xf32>
    %68 = arith.subf %64, %67 : vector<8x16xf32>
    %69 = math.exp %68 : vector<8x16xf32>
    %cst_40 = arith.constant dense<0.000000e+00> : vector<8xf32>
    %70 = vector.multi_reduction <add>, %69, %cst_40 [1] : vector<8x16xf32> to vector<8xf32>
    %71 = vector.shape_cast %70 : vector<8xf32> to vector<8x1xf32>
    %72 = tpu.reciprocal %71 {approx = true} : vector<8x1xf32> -> vector<8x1xf32>
    %73 = vector.broadcast %72 : vector<8x1xf32> to vector<8x16xf32>
    %74 = arith.mulf %69, %73 : vector<8x16xf32>
    %cst_41 = arith.constant 9.99999974E-5 : f32
    %cst_42 = arith.constant 0.999899983 : f32
    %75 = vector.broadcast %cst_41 : f32 to vector<8x16xf32>
    %76 = arith.maximumf %75, %74 : vector<8x16xf32>
    %77 = vector.broadcast %cst_42 : f32 to vector<8x16xf32>
    %78 = arith.minimumf %77, %76 : vector<8x16xf32>
    %cst_43 = arith.constant dense<0.000000e+00> : vector<8xf32>
    %79 = vector.multi_reduction <add>, %78, %cst_43 [1] : vector<8x16xf32> to vector<8xf32>
    %80 = vector.shape_cast %79 : vector<8xf32> to vector<8x1xf32>
    %81 = tpu.reciprocal %80 {approx = true} : vector<8x1xf32> -> vector<8x1xf32>
    %82 = vector.broadcast %81 : vector<8x1xf32> to vector<8x16xf32>
    %83 = arith.mulf %78, %82 : vector<8x16xf32>
    %c0_i32_44 = arith.constant 0 : i32
    %c0_i32_45 = arith.constant 0 : i32
    %84 = tpu.memref_slice %arg3[%3, %c0_i32_45] : memref<64x16xf32, #tpu.memory_space<any>> -> memref<1x16xf32, #tpu.memory_space<any>>
    %c0_i32_46 = arith.constant 0 : i32
    %c0_i32_47 = arith.constant 0 : i32
    %85 = tpu.memref_slice %arg6[%c0_i32_46, %c0_i32_47] : memref<8x16xf32, #tpu.memory_space<vmem>> -> memref<1x16xf32, #tpu.memory_space<vmem>>
    %86 = tpu.memref_slice %arg7[%c0_i32_44] : memref<8x!tpu.dma_semaphore, #tpu.memory_space<semaphore_mem>> -> memref<1x!tpu.dma_semaphore, #tpu.memory_space<semaphore_mem>>
    %87 = tpu.memref_squeeze %86 : memref<1x!tpu.dma_semaphore, #tpu.memory_space<semaphore_mem>> -> memref<!tpu.dma_semaphore, #tpu.memory_space<semaphore_mem>>
    tpu.wait_dma2 semaphore(%87 : memref<!tpu.dma_semaphore, #tpu.memory_space<semaphore_mem>>) src(%84 : memref<1x16xf32, #tpu.memory_space<any>>) dst(%85 : memref<1x16xf32, #tpu.memory_space<vmem>>)
    %c1_i32_48 = arith.constant 1 : i32
    %c0_i32_49 = arith.constant 0 : i32
    %88 = tpu.memref_slice %arg3[%11, %c0_i32_49] : memref<64x16xf32, #tpu.memory_space<any>> -> memref<1x16xf32, #tpu.memory_space<any>>
    %c1_i32_50 = arith.constant 1 : i32
    %c0_i32_51 = arith.constant 0 : i32
    %89 = tpu.memref_slice %arg6[%c1_i32_50, %c0_i32_51] : memref<8x16xf32, #tpu.memory_space<vmem>> -> memref<1x16xf32, #tpu.memory_space<vmem>>
    %90 = tpu.memref_slice %arg7[%c1_i32_48] : memref<8x!tpu.dma_semaphore, #tpu.memory_space<semaphore_mem>> -> memref<1x!tpu.dma_semaphore, #tpu.memory_space<semaphore_mem>>
    %91 = tpu.memref_squeeze %90 : memref<1x!tpu.dma_semaphore, #tpu.memory_space<semaphore_mem>> -> memref<!tpu.dma_semaphore, #tpu.memory_space<semaphore_mem>>
    tpu.wait_dma2 semaphore(%91 : memref<!tpu.dma_semaphore, #tpu.memory_space<semaphore_mem>>) src(%88 : memref<1x16xf32, #tpu.memory_space<any>>) dst(%89 : memref<1x16xf32, #tpu.memory_space<vmem>>)
    %c2_i32_52 = arith.constant 2 : i32
    %c0_i32_53 = arith.constant 0 : i32
    %92 = tpu.memref_slice %arg3[%19, %c0_i32_53] : memref<64x16xf32, #tpu.memory_space<any>> -> memref<1x16xf32, #tpu.memory_space<any>>
    %c2_i32_54 = arith.constant 2 : i32
    %c0_i32_55 = arith.constant 0 : i32
    %93 = tpu.memref_slice %arg6[%c2_i32_54, %c0_i32_55] : memref<8x16xf32, #tpu.memory_space<vmem>> -> memref<1x16xf32, #tpu.memory_space<vmem>>
    %94 = tpu.memref_slice %arg7[%c2_i32_52] : memref<8x!tpu.dma_semaphore, #tpu.memory_space<semaphore_mem>> -> memref<1x!tpu.dma_semaphore, #tpu.memory_space<semaphore_mem>>
    %95 = tpu.memref_squeeze %94 : memref<1x!tpu.dma_semaphore, #tpu.memory_space<semaphore_mem>> -> memref<!tpu.dma_semaphore, #tpu.memory_space<semaphore_mem>>
    tpu.wait_dma2 semaphore(%95 : memref<!tpu.dma_semaphore, #tpu.memory_space<semaphore_mem>>) src(%92 : memref<1x16xf32, #tpu.memory_space<any>>) dst(%93 : memref<1x16xf32, #tpu.memory_space<vmem>>)
    %c3_i32_56 = arith.constant 3 : i32
    %c0_i32_57 = arith.constant 0 : i32
    %96 = tpu.memref_slice %arg3[%27, %c0_i32_57] : memref<64x16xf32, #tpu.memory_space<any>> -> memref<1x16xf32, #tpu.memory_space<any>>
    %c3_i32_58 = arith.constant 3 : i32
    %c0_i32_59 = arith.constant 0 : i32
    %97 = tpu.memref_slice %arg6[%c3_i32_58, %c0_i32_59] : memref<8x16xf32, #tpu.memory_space<vmem>> -> memref<1x16xf32, #tpu.memory_space<vmem>>
    %98 = tpu.memref_slice %arg7[%c3_i32_56] : memref<8x!tpu.dma_semaphore, #tpu.memory_space<semaphore_mem>> -> memref<1x!tpu.dma_semaphore, #tpu.memory_space<semaphore_mem>>
    %99 = tpu.memref_squeeze %98 : memref<1x!tpu.dma_semaphore, #tpu.memory_space<semaphore_mem>> -> memref<!tpu.dma_semaphore, #tpu.memory_space<semaphore_mem>>
    tpu.wait_dma2 semaphore(%99 : memref<!tpu.dma_semaphore, #tpu.memory_space<semaphore_mem>>) src(%96 : memref<1x16xf32, #tpu.memory_space<any>>) dst(%97 : memref<1x16xf32, #tpu.memory_space<vmem>>)
    %c4_i32_60 = arith.constant 4 : i32
    %c0_i32_61 = arith.constant 0 : i32
    %100 = tpu.memref_slice %arg3[%35, %c0_i32_61] : memref<64x16xf32, #tpu.memory_space<any>> -> memref<1x16xf32, #tpu.memory_space<any>>
    %c4_i32_62 = arith.constant 4 : i32
    %c0_i32_63 = arith.constant 0 : i32
    %101 = tpu.memref_slice %arg6[%c4_i32_62, %c0_i32_63] : memref<8x16xf32, #tpu.memory_space<vmem>> -> memref<1x16xf32, #tpu.memory_space<vmem>>
    %102 = tpu.memref_slice %arg7[%c4_i32_60] : memref<8x!tpu.dma_semaphore, #tpu.memory_space<semaphore_mem>> -> memref<1x!tpu.dma_semaphore, #tpu.memory_space<semaphore_mem>>
    %103 = tpu.memref_squeeze %102 : memref<1x!tpu.dma_semaphore, #tpu.memory_space<semaphore_mem>> -> memref<!tpu.dma_semaphore, #tpu.memory_space<semaphore_mem>>
    tpu.wait_dma2 semaphore(%103 : memref<!tpu.dma_semaphore, #tpu.memory_space<semaphore_mem>>) src(%100 : memref<1x16xf32, #tpu.memory_space<any>>) dst(%101 : memref<1x16xf32, #tpu.memory_space<vmem>>)
    %c5_i32_64 = arith.constant 5 : i32
    %c0_i32_65 = arith.constant 0 : i32
    %104 = tpu.memref_slice %arg3[%43, %c0_i32_65] : memref<64x16xf32, #tpu.memory_space<any>> -> memref<1x16xf32, #tpu.memory_space<any>>
    %c5_i32_66 = arith.constant 5 : i32
    %c0_i32_67 = arith.constant 0 : i32
    %105 = tpu.memref_slice %arg6[%c5_i32_66, %c0_i32_67] : memref<8x16xf32, #tpu.memory_space<vmem>> -> memref<1x16xf32, #tpu.memory_space<vmem>>
    %106 = tpu.memref_slice %arg7[%c5_i32_64] : memref<8x!tpu.dma_semaphore, #tpu.memory_space<semaphore_mem>> -> memref<1x!tpu.dma_semaphore, #tpu.memory_space<semaphore_mem>>
    %107 = tpu.memref_squeeze %106 : memref<1x!tpu.dma_semaphore, #tpu.memory_space<semaphore_mem>> -> memref<!tpu.dma_semaphore, #tpu.memory_space<semaphore_mem>>
    tpu.wait_dma2 semaphore(%107 : memref<!tpu.dma_semaphore, #tpu.memory_space<semaphore_mem>>) src(%104 : memref<1x16xf32, #tpu.memory_space<any>>) dst(%105 : memref<1x16xf32, #tpu.memory_space<vmem>>)
    %c6_i32_68 = arith.constant 6 : i32
    %c0_i32_69 = arith.constant 0 : i32
    %108 = tpu.memref_slice %arg3[%51, %c0_i32_69] : memref<64x16xf32, #tpu.memory_space<any>> -> memref<1x16xf32, #tpu.memory_space<any>>
    %c6_i32_70 = arith.constant 6 : i32
    %c0_i32_71 = arith.constant 0 : i32
    %109 = tpu.memref_slice %arg6[%c6_i32_70, %c0_i32_71] : memref<8x16xf32, #tpu.memory_space<vmem>> -> memref<1x16xf32, #tpu.memory_space<vmem>>
    %110 = tpu.memref_slice %arg7[%c6_i32_68] : memref<8x!tpu.dma_semaphore, #tpu.memory_space<semaphore_mem>> -> memref<1x!tpu.dma_semaphore, #tpu.memory_space<semaphore_mem>>
    %111 = tpu.memref_squeeze %110 : memref<1x!tpu.dma_semaphore, #tpu.memory_space<semaphore_mem>> -> memref<!tpu.dma_semaphore, #tpu.memory_space<semaphore_mem>>
    tpu.wait_dma2 semaphore(%111 : memref<!tpu.dma_semaphore, #tpu.memory_space<semaphore_mem>>) src(%108 : memref<1x16xf32, #tpu.memory_space<any>>) dst(%109 : memref<1x16xf32, #tpu.memory_space<vmem>>)
    %c7_i32_72 = arith.constant 7 : i32
    %c0_i32_73 = arith.constant 0 : i32
    %112 = tpu.memref_slice %arg3[%59, %c0_i32_73] : memref<64x16xf32, #tpu.memory_space<any>> -> memref<1x16xf32, #tpu.memory_space<any>>
    %c7_i32_74 = arith.constant 7 : i32
    %c0_i32_75 = arith.constant 0 : i32
    %113 = tpu.memref_slice %arg6[%c7_i32_74, %c0_i32_75] : memref<8x16xf32, #tpu.memory_space<vmem>> -> memref<1x16xf32, #tpu.memory_space<vmem>>
    %114 = tpu.memref_slice %arg7[%c7_i32_72] : memref<8x!tpu.dma_semaphore, #tpu.memory_space<semaphore_mem>> -> memref<1x!tpu.dma_semaphore, #tpu.memory_space<semaphore_mem>>
    %115 = tpu.memref_squeeze %114 : memref<1x!tpu.dma_semaphore, #tpu.memory_space<semaphore_mem>> -> memref<!tpu.dma_semaphore, #tpu.memory_space<semaphore_mem>>
    tpu.wait_dma2 semaphore(%115 : memref<!tpu.dma_semaphore, #tpu.memory_space<semaphore_mem>>) src(%112 : memref<1x16xf32, #tpu.memory_space<any>>) dst(%113 : memref<1x16xf32, #tpu.memory_space<vmem>>)
    %c0_76 = arith.constant 0 : index
    %c0_77 = arith.constant 0 : index
    %116 = vector.load %arg6[%c0_76, %c0_77] : memref<8x16xf32, #tpu.memory_space<vmem>>, vector<8x16xf32>
    %cst_78 = arith.constant 6.000000e-01 : f32
    %117 = vector.broadcast %cst_78 : f32 to vector<8x16xf32>
    %118 = arith.mulf %117, %116 : vector<8x16xf32>
    %cst_79 = arith.constant 4.000000e-01 : f32
    %119 = vector.broadcast %cst_79 : f32 to vector<8x16xf32>
    %120 = arith.mulf %119, %83 : vector<8x16xf32>
    %121 = arith.addf %118, %120 : vector<8x16xf32>
    %c0_80 = arith.constant 0 : index
    %c0_81 = arith.constant 0 : index
    %122 = vector.load %arg6[%c0_80, %c0_81] : memref<8x16xf32, #tpu.memory_space<vmem>>, vector<8x16xf32>
    tpu.vector_store %arg6[%c0_80, %c0_81], %121 {strides = array<i32>} : memref<8x16xf32, #tpu.memory_space<vmem>>, vector<8x16xf32>,
    %c8_i32_82 = arith.constant 8 : i32
    %123 = arith.muli %arg0, %c8_i32_82 : i32
    %c0_i32_83 = arith.constant 0 : i32
    %124 = arith.addi %123, %c0_i32_83 : i32
    %125 = arith.index_cast %124 : i32 to index
    %126 = memref.load %arg1[%125] : memref<8xi32, #tpu.memory_space<smem>>
    %c0_i32_84 = arith.constant 0 : i32
    %c0_i32_85 = arith.constant 0 : i32
    %c0_i32_86 = arith.constant 0 : i32
    %127 = tpu.memref_slice %arg6[%c0_i32_85, %c0_i32_86] : memref<8x16xf32, #tpu.memory_space<vmem>> -> memref<1x16xf32, #tpu.memory_space<vmem>>
    %c0_i32_87 = arith.constant 0 : i32
    %128 = tpu.memref_slice %arg4[%126, %c0_i32_87] : memref<64x16xf32, #tpu.memory_space<any>> -> memref<1x16xf32, #tpu.memory_space<any>>
    %129 = tpu.memref_slice %arg8[%c0_i32_84] : memref<8x!tpu.dma_semaphore, #tpu.memory_space<semaphore_mem>> -> memref<1x!tpu.dma_semaphore, #tpu.memory_space<semaphore_mem>>
    %130 = tpu.memref_squeeze %129 : memref<1x!tpu.dma_semaphore, #tpu.memory_space<semaphore_mem>> -> memref<!tpu.dma_semaphore, #tpu.memory_space<semaphore_mem>>
    tpu.enqueue_dma source(%127 : memref<1x16xf32, #tpu.memory_space<vmem>>) target(%128 : memref<1x16xf32, #tpu.memory_space<any>>) target_semaphore(%130 : memref<!tpu.dma_semaphore, #tpu.memory_space<semaphore_mem>>)
    %c8_i32_88 = arith.constant 8 : i32
    %131 = arith.muli %arg0, %c8_i32_88 : i32
    %c1_i32_89 = arith.constant 1 : i32
    %132 = arith.addi %131, %c1_i32_89 : i32
    %133 = arith.index_cast %132 : i32 to index
    %134 = memref.load %arg1[%133] : memref<8xi32, #tpu.memory_space<smem>>
    %c1_i32_90 = arith.constant 1 : i32
    %c1_i32_91 = arith.constant 1 : i32
    %c0_i32_92 = arith.constant 0 : i32
    %135 = tpu.memref_slice %arg6[%c1_i32_91, %c0_i32_92] : memref<8x16xf32, #tpu.memory_space<vmem>> -> memref<1x16xf32, #tpu.memory_space<vmem>>
    %c0_i32_93 = arith.constant 0 : i32
    %136 = tpu.memref_slice %arg4[%134, %c0_i32_93] : memref<64x16xf32, #tpu.memory_space<any>> -> memref<1x16xf32, #tpu.memory_space<any>>
    %137 = tpu.memref_slice %arg8[%c1_i32_90] : memref<8x!tpu.dma_semaphore, #tpu.memory_space<semaphore_mem>> -> memref<1x!tpu.dma_semaphore, #tpu.memory_space<semaphore_mem>>
    %138 = tpu.memref_squeeze %137 : memref<1x!tpu.dma_semaphore, #tpu.memory_space<semaphore_mem>> -> memref<!tpu.dma_semaphore, #tpu.memory_space<semaphore_mem>>
    tpu.enqueue_dma source(%135 : memref<1x16xf32, #tpu.memory_space<vmem>>) target(%136 : memref<1x16xf32, #tpu.memory_space<any>>) target_semaphore(%138 : memref<!tpu.dma_semaphore, #tpu.memory_space<semaphore_mem>>)
    %c8_i32_94 = arith.constant 8 : i32
    %139 = arith.muli %arg0, %c8_i32_94 : i32
    %c2_i32_95 = arith.constant 2 : i32
    %140 = arith.addi %139, %c2_i32_95 : i32
    %141 = arith.index_cast %140 : i32 to index
    %142 = memref.load %arg1[%141] : memref<8xi32, #tpu.memory_space<smem>>
    %c2_i32_96 = arith.constant 2 : i32
    %c2_i32_97 = arith.constant 2 : i32
    %c0_i32_98 = arith.constant 0 : i32
    %143 = tpu.memref_slice %arg6[%c2_i32_97, %c0_i32_98] : memref<8x16xf32, #tpu.memory_space<vmem>> -> memref<1x16xf32, #tpu.memory_space<vmem>>
    %c0_i32_99 = arith.constant 0 : i32
    %144 = tpu.memref_slice %arg4[%142, %c0_i32_99] : memref<64x16xf32, #tpu.memory_space<any>> -> memref<1x16xf32, #tpu.memory_space<any>>
    %145 = tpu.memref_slice %arg8[%c2_i32_96] : memref<8x!tpu.dma_semaphore, #tpu.memory_space<semaphore_mem>> -> memref<1x!tpu.dma_semaphore, #tpu.memory_space<semaphore_mem>>
    %146 = tpu.memref_squeeze %145 : memref<1x!tpu.dma_semaphore, #tpu.memory_space<semaphore_mem>> -> memref<!tpu.dma_semaphore, #tpu.memory_space<semaphore_mem>>
    tpu.enqueue_dma source(%143 : memref<1x16xf32, #tpu.memory_space<vmem>>) target(%144 : memref<1x16xf32, #tpu.memory_space<any>>) target_semaphore(%146 : memref<!tpu.dma_semaphore, #tpu.memory_space<semaphore_mem>>)
    %c8_i32_100 = arith.constant 8 : i32
    %147 = arith.muli %arg0, %c8_i32_100 : i32
    %c3_i32_101 = arith.constant 3 : i32
    %148 = arith.addi %147, %c3_i32_101 : i32
    %149 = arith.index_cast %148 : i32 to index
    %150 = memref.load %arg1[%149] : memref<8xi32, #tpu.memory_space<smem>>
    %c3_i32_102 = arith.constant 3 : i32
    %c3_i32_103 = arith.constant 3 : i32
    %c0_i32_104 = arith.constant 0 : i32
    %151 = tpu.memref_slice %arg6[%c3_i32_103, %c0_i32_104] : memref<8x16xf32, #tpu.memory_space<vmem>> -> memref<1x16xf32, #tpu.memory_space<vmem>>
    %c0_i32_105 = arith.constant 0 : i32
    %152 = tpu.memref_slice %arg4[%150, %c0_i32_105] : memref<64x16xf32, #tpu.memory_space<any>> -> memref<1x16xf32, #tpu.memory_space<any>>
    %153 = tpu.memref_slice %arg8[%c3_i32_102] : memref<8x!tpu.dma_semaphore, #tpu.memory_space<semaphore_mem>> -> memref<1x!tpu.dma_semaphore, #tpu.memory_space<semaphore_mem>>
    %154 = tpu.memref_squeeze %153 : memref<1x!tpu.dma_semaphore, #tpu.memory_space<semaphore_mem>> -> memref<!tpu.dma_semaphore, #tpu.memory_space<semaphore_mem>>
    tpu.enqueue_dma source(%151 : memref<1x16xf32, #tpu.memory_space<vmem>>) target(%152 : memref<1x16xf32, #tpu.memory_space<any>>) target_semaphore(%154 : memref<!tpu.dma_semaphore, #tpu.memory_space<semaphore_mem>>)
    %c8_i32_106 = arith.constant 8 : i32
    %155 = arith.muli %arg0, %c8_i32_106 : i32
    %c4_i32_107 = arith.constant 4 : i32
    %156 = arith.addi %155, %c4_i32_107 : i32
    %157 = arith.index_cast %156 : i32 to index
    %158 = memref.load %arg1[%157] : memref<8xi32, #tpu.memory_space<smem>>
    %c4_i32_108 = arith.constant 4 : i32
    %c4_i32_109 = arith.constant 4 : i32
    %c0_i32_110 = arith.constant 0 : i32
    %159 = tpu.memref_slice %arg6[%c4_i32_109, %c0_i32_110] : memref<8x16xf32, #tpu.memory_space<vmem>> -> memref<1x16xf32, #tpu.memory_space<vmem>>
    %c0_i32_111 = arith.constant 0 : i32
    %160 = tpu.memref_slice %arg4[%158, %c0_i32_111] : memref<64x16xf32, #tpu.memory_space<any>> -> memref<1x16xf32, #tpu.memory_space<any>>
    %161 = tpu.memref_slice %arg8[%c4_i32_108] : memref<8x!tpu.dma_semaphore, #tpu.memory_space<semaphore_mem>> -> memref<1x!tpu.dma_semaphore, #tpu.memory_space<semaphore_mem>>
    %162 = tpu.memref_squeeze %161 : memref<1x!tpu.dma_semaphore, #tpu.memory_space<semaphore_mem>> -> memref<!tpu.dma_semaphore, #tpu.memory_space<semaphore_mem>>
    tpu.enqueue_dma source(%159 : memref<1x16xf32, #tpu.memory_space<vmem>>) target(%160 : memref<1x16xf32, #tpu.memory_space<any>>) target_semaphore(%162 : memref<!tpu.dma_semaphore, #tpu.memory_space<semaphore_mem>>)
    %c8_i32_112 = arith.constant 8 : i32
    %163 = arith.muli %arg0, %c8_i32_112 : i32
    %c5_i32_113 = arith.constant 5 : i32
    %164 = arith.addi %163, %c5_i32_113 : i32
    %165 = arith.index_cast %164 : i32 to index
    %166 = memref.load %arg1[%165] : memref<8xi32, #tpu.memory_space<smem>>
    %c5_i32_114 = arith.constant 5 : i32
    %c5_i32_115 = arith.constant 5 : i32
    %c0_i32_116 = arith.constant 0 : i32
    %167 = tpu.memref_slice %arg6[%c5_i32_115, %c0_i32_116] : memref<8x16xf32, #tpu.memory_space<vmem>> -> memref<1x16xf32, #tpu.memory_space<vmem>>
    %c0_i32_117 = arith.constant 0 : i32
    %168 = tpu.memref_slice %arg4[%166, %c0_i32_117] : memref<64x16xf32, #tpu.memory_space<any>> -> memref<1x16xf32, #tpu.memory_space<any>>
    %169 = tpu.memref_slice %arg8[%c5_i32_114] : memref<8x!tpu.dma_semaphore, #tpu.memory_space<semaphore_mem>> -> memref<1x!tpu.dma_semaphore, #tpu.memory_space<semaphore_mem>>
    %170 = tpu.memref_squeeze %169 : memref<1x!tpu.dma_semaphore, #tpu.memory_space<semaphore_mem>> -> memref<!tpu.dma_semaphore, #tpu.memory_space<semaphore_mem>>
    tpu.enqueue_dma source(%167 : memref<1x16xf32, #tpu.memory_space<vmem>>) target(%168 : memref<1x16xf32, #tpu.memory_space<any>>) target_semaphore(%170 : memref<!tpu.dma_semaphore, #tpu.memory_space<semaphore_mem>>)
    %c8_i32_118 = arith.constant 8 : i32
    %171 = arith.muli %arg0, %c8_i32_118 : i32
    %c6_i32_119 = arith.constant 6 : i32
    %172 = arith.addi %171, %c6_i32_119 : i32
    %173 = arith.index_cast %172 : i32 to index
    %174 = memref.load %arg1[%173] : memref<8xi32, #tpu.memory_space<smem>>
    %c6_i32_120 = arith.constant 6 : i32
    %c6_i32_121 = arith.constant 6 : i32
    %c0_i32_122 = arith.constant 0 : i32
    %175 = tpu.memref_slice %arg6[%c6_i32_121, %c0_i32_122] : memref<8x16xf32, #tpu.memory_space<vmem>> -> memref<1x16xf32, #tpu.memory_space<vmem>>
    %c0_i32_123 = arith.constant 0 : i32
    %176 = tpu.memref_slice %arg4[%174, %c0_i32_123] : memref<64x16xf32, #tpu.memory_space<any>> -> memref<1x16xf32, #tpu.memory_space<any>>
    %177 = tpu.memref_slice %arg8[%c6_i32_120] : memref<8x!tpu.dma_semaphore, #tpu.memory_space<semaphore_mem>> -> memref<1x!tpu.dma_semaphore, #tpu.memory_space<semaphore_mem>>
    %178 = tpu.memref_squeeze %177 : memref<1x!tpu.dma_semaphore, #tpu.memory_space<semaphore_mem>> -> memref<!tpu.dma_semaphore, #tpu.memory_space<semaphore_mem>>
    tpu.enqueue_dma source(%175 : memref<1x16xf32, #tpu.memory_space<vmem>>) target(%176 : memref<1x16xf32, #tpu.memory_space<any>>) target_semaphore(%178 : memref<!tpu.dma_semaphore, #tpu.memory_space<semaphore_mem>>)
    %c8_i32_124 = arith.constant 8 : i32
    %179 = arith.muli %arg0, %c8_i32_124 : i32
    %c7_i32_125 = arith.constant 7 : i32
    %180 = arith.addi %179, %c7_i32_125 : i32
    %181 = arith.index_cast %180 : i32 to index
    %182 = memref.load %arg1[%181] : memref<8xi32, #tpu.memory_space<smem>>
    %c7_i32_126 = arith.constant 7 : i32
    %c7_i32_127 = arith.constant 7 : i32
    %c0_i32_128 = arith.constant 0 : i32
    %183 = tpu.memref_slice %arg6[%c7_i32_127, %c0_i32_128] : memref<8x16xf32, #tpu.memory_space<vmem>> -> memref<1x16xf32, #tpu.memory_space<vmem>>
    %c0_i32_129 = arith.constant 0 : i32
    %184 = tpu.memref_slice %arg4[%182, %c0_i32_129] : memref<64x16xf32, #tpu.memory_space<any>> -> memref<1x16xf32, #tpu.memory_space<any>>
    %185 = tpu.memref_slice %arg8[%c7_i32_126] : memref<8x!tpu.dma_semaphore, #tpu.memory_space<semaphore_mem>> -> memref<1x!tpu.dma_semaphore, #tpu.memory_space<semaphore_mem>>
    %186 = tpu.memref_squeeze %185 : memref<1x!tpu.dma_semaphore, #tpu.memory_space<semaphore_mem>> -> memref<!tpu.dma_semaphore, #tpu.memory_space<semaphore_mem>>
    tpu.enqueue_dma source(%183 : memref<1x16xf32, #tpu.memory_space<vmem>>) target(%184 : memref<1x16xf32, #tpu.memory_space<any>>) target_semaphore(%186 : memref<!tpu.dma_semaphore, #tpu.memory_space<semaphore_mem>>)
    %187 = arith.mulf %121, %78 : vector<8x16xf32>
    %cst_130 = arith.constant dense<0.000000e+00> : vector<8xf32>
    %188 = vector.multi_reduction <add>, %187, %cst_130 [1] : vector<8x16xf32> to vector<8xf32>
    %189 = vector.shape_cast %188 : vector<8xf32> to vector<8x1xf32>
    %cst_131 = arith.constant 1.000000e+00 : f32
    %190 = vector.broadcast %cst_131 : f32 to vector<8x1xf32>
    %191 = arith.subf %190, %189 : vector<8x1xf32>
    %192 = math.log %191 : vector<8x1xf32>
    %cst_132 = arith.constant dense<0.000000e+00> : vector<1xf32>
    %193 = vector.multi_reduction <add>, %192, %cst_132 [0] : vector<8x1xf32> to vector<1xf32>
    %194 = vector.shape_cast %193 : vector<1xf32> to vector<1x1xf32>
    %cst_133 = arith.constant 3.750000e-01 : f32
    %195 = vector.broadcast %cst_133 : f32 to vector<1x1xf32>
    %196 = arith.mulf %194, %195 : vector<1x1xf32>
    %197 = vector.shape_cast %196 : vector<1x1xf32> to vector<1x1xf32>
    %198 = vector.broadcast %197 : vector<1x1xf32> to vector<1x128xf32>
    %c0_134 = arith.constant 0 : index
    %c0_135 = arith.constant 0 : index
    %199 = vector.load %arg5[%c0_134, %c0_135] : memref<1x128xf32, #tpu.memory_space<vmem>>, vector<1x128xf32>
    tpu.vector_store %arg5[%c0_134, %c0_135], %198 {strides = array<i32>} : memref<1x128xf32, #tpu.memory_space<vmem>>, vector<1x128xf32>,
    %c0_i32_136 = arith.constant 0 : i32
    %c0_i32_137 = arith.constant 0 : i32
    %c0_i32_138 = arith.constant 0 : i32
    %200 = tpu.memref_slice %arg6[%c0_i32_137, %c0_i32_138] : memref<8x16xf32, #tpu.memory_space<vmem>> -> memref<1x16xf32, #tpu.memory_space<vmem>>
    %c0_i32_139 = arith.constant 0 : i32
    %201 = tpu.memref_slice %arg4[%126, %c0_i32_139] : memref<64x16xf32, #tpu.memory_space<any>> -> memref<1x16xf32, #tpu.memory_space<any>>
    %202 = tpu.memref_slice %arg8[%c0_i32_136] : memref<8x!tpu.dma_semaphore, #tpu.memory_space<semaphore_mem>> -> memref<1x!tpu.dma_semaphore, #tpu.memory_space<semaphore_mem>>
    %203 = tpu.memref_squeeze %202 : memref<1x!tpu.dma_semaphore, #tpu.memory_space<semaphore_mem>> -> memref<!tpu.dma_semaphore, #tpu.memory_space<semaphore_mem>>
    tpu.wait_dma2 semaphore(%203 : memref<!tpu.dma_semaphore, #tpu.memory_space<semaphore_mem>>) src(%200 : memref<1x16xf32, #tpu.memory_space<vmem>>) dst(%201 : memref<1x16xf32, #tpu.memory_space<any>>)
    %c1_i32_140 = arith.constant 1 : i32
    %c1_i32_141 = arith.constant 1 : i32
    %c0_i32_142 = arith.constant 0 : i32
    %204 = tpu.memref_slice %arg6[%c1_i32_141, %c0_i32_142] : memref<8x16xf32, #tpu.memory_space<vmem>> -> memref<1x16xf32, #tpu.memory_space<vmem>>
    %c0_i32_143 = arith.constant 0 : i32
    %205 = tpu.memref_slice %arg4[%134, %c0_i32_143] : memref<64x16xf32, #tpu.memory_space<any>> -> memref<1x16xf32, #tpu.memory_space<any>>
    %206 = tpu.memref_slice %arg8[%c1_i32_140] : memref<8x!tpu.dma_semaphore, #tpu.memory_space<semaphore_mem>> -> memref<1x!tpu.dma_semaphore, #tpu.memory_space<semaphore_mem>>
    %207 = tpu.memref_squeeze %206 : memref<1x!tpu.dma_semaphore, #tpu.memory_space<semaphore_mem>> -> memref<!tpu.dma_semaphore, #tpu.memory_space<semaphore_mem>>
    tpu.wait_dma2 semaphore(%207 : memref<!tpu.dma_semaphore, #tpu.memory_space<semaphore_mem>>) src(%204 : memref<1x16xf32, #tpu.memory_space<vmem>>) dst(%205 : memref<1x16xf32, #tpu.memory_space<any>>)
    %c2_i32_144 = arith.constant 2 : i32
    %c2_i32_145 = arith.constant 2 : i32
    %c0_i32_146 = arith.constant 0 : i32
    %208 = tpu.memref_slice %arg6[%c2_i32_145, %c0_i32_146] : memref<8x16xf32, #tpu.memory_space<vmem>> -> memref<1x16xf32, #tpu.memory_space<vmem>>
    %c0_i32_147 = arith.constant 0 : i32
    %209 = tpu.memref_slice %arg4[%142, %c0_i32_147] : memref<64x16xf32, #tpu.memory_space<any>> -> memref<1x16xf32, #tpu.memory_space<any>>
    %210 = tpu.memref_slice %arg8[%c2_i32_144] : memref<8x!tpu.dma_semaphore, #tpu.memory_space<semaphore_mem>> -> memref<1x!tpu.dma_semaphore, #tpu.memory_space<semaphore_mem>>
    %211 = tpu.memref_squeeze %210 : memref<1x!tpu.dma_semaphore, #tpu.memory_space<semaphore_mem>> -> memref<!tpu.dma_semaphore, #tpu.memory_space<semaphore_mem>>
    tpu.wait_dma2 semaphore(%211 : memref<!tpu.dma_semaphore, #tpu.memory_space<semaphore_mem>>) src(%208 : memref<1x16xf32, #tpu.memory_space<vmem>>) dst(%209 : memref<1x16xf32, #tpu.memory_space<any>>)
    %c3_i32_148 = arith.constant 3 : i32
    %c3_i32_149 = arith.constant 3 : i32
    %c0_i32_150 = arith.constant 0 : i32
    %212 = tpu.memref_slice %arg6[%c3_i32_149, %c0_i32_150] : memref<8x16xf32, #tpu.memory_space<vmem>> -> memref<1x16xf32, #tpu.memory_space<vmem>>
    %c0_i32_151 = arith.constant 0 : i32
    %213 = tpu.memref_slice %arg4[%150, %c0_i32_151] : memref<64x16xf32, #tpu.memory_space<any>> -> memref<1x16xf32, #tpu.memory_space<any>>
    %214 = tpu.memref_slice %arg8[%c3_i32_148] : memref<8x!tpu.dma_semaphore, #tpu.memory_space<semaphore_mem>> -> memref<1x!tpu.dma_semaphore, #tpu.memory_space<semaphore_mem>>
    %215 = tpu.memref_squeeze %214 : memref<1x!tpu.dma_semaphore, #tpu.memory_space<semaphore_mem>> -> memref<!tpu.dma_semaphore, #tpu.memory_space<semaphore_mem>>
    tpu.wait_dma2 semaphore(%215 : memref<!tpu.dma_semaphore, #tpu.memory_space<semaphore_mem>>) src(%212 : memref<1x16xf32, #tpu.memory_space<vmem>>) dst(%213 : memref<1x16xf32, #tpu.memory_space<any>>)
    %c4_i32_152 = arith.constant 4 : i32
    %c4_i32_153 = arith.constant 4 : i32
    %c0_i32_154 = arith.constant 0 : i32
    %216 = tpu.memref_slice %arg6[%c4_i32_153, %c0_i32_154] : memref<8x16xf32, #tpu.memory_space<vmem>> -> memref<1x16xf32, #tpu.memory_space<vmem>>
    %c0_i32_155 = arith.constant 0 : i32
    %217 = tpu.memref_slice %arg4[%158, %c0_i32_155] : memref<64x16xf32, #tpu.memory_space<any>> -> memref<1x16xf32, #tpu.memory_space<any>>
    %218 = tpu.memref_slice %arg8[%c4_i32_152] : memref<8x!tpu.dma_semaphore, #tpu.memory_space<semaphore_mem>> -> memref<1x!tpu.dma_semaphore, #tpu.memory_space<semaphore_mem>>
    %219 = tpu.memref_squeeze %218 : memref<1x!tpu.dma_semaphore, #tpu.memory_space<semaphore_mem>> -> memref<!tpu.dma_semaphore, #tpu.memory_space<semaphore_mem>>
    tpu.wait_dma2 semaphore(%219 : memref<!tpu.dma_semaphore, #tpu.memory_space<semaphore_mem>>) src(%216 : memref<1x16xf32, #tpu.memory_space<vmem>>) dst(%217 : memref<1x16xf32, #tpu.memory_space<any>>)
    %c5_i32_156 = arith.constant 5 : i32
    %c5_i32_157 = arith.constant 5 : i32
    %c0_i32_158 = arith.constant 0 : i32
    %220 = tpu.memref_slice %arg6[%c5_i32_157, %c0_i32_158] : memref<8x16xf32, #tpu.memory_space<vmem>> -> memref<1x16xf32, #tpu.memory_space<vmem>>
    %c0_i32_159 = arith.constant 0 : i32
    %221 = tpu.memref_slice %arg4[%166, %c0_i32_159] : memref<64x16xf32, #tpu.memory_space<any>> -> memref<1x16xf32, #tpu.memory_space<any>>
    %222 = tpu.memref_slice %arg8[%c5_i32_156] : memref<8x!tpu.dma_semaphore, #tpu.memory_space<semaphore_mem>> -> memref<1x!tpu.dma_semaphore, #tpu.memory_space<semaphore_mem>>
    %223 = tpu.memref_squeeze %222 : memref<1x!tpu.dma_semaphore, #tpu.memory_space<semaphore_mem>> -> memref<!tpu.dma_semaphore, #tpu.memory_space<semaphore_mem>>
    tpu.wait_dma2 semaphore(%223 : memref<!tpu.dma_semaphore, #tpu.memory_space<semaphore_mem>>) src(%220 : memref<1x16xf32, #tpu.memory_space<vmem>>) dst(%221 : memref<1x16xf32, #tpu.memory_space<any>>)
    %c6_i32_160 = arith.constant 6 : i32
    %c6_i32_161 = arith.constant 6 : i32
    %c0_i32_162 = arith.constant 0 : i32
    %224 = tpu.memref_slice %arg6[%c6_i32_161, %c0_i32_162] : memref<8x16xf32, #tpu.memory_space<vmem>> -> memref<1x16xf32, #tpu.memory_space<vmem>>
    %c0_i32_163 = arith.constant 0 : i32
    %225 = tpu.memref_slice %arg4[%174, %c0_i32_163] : memref<64x16xf32, #tpu.memory_space<any>> -> memref<1x16xf32, #tpu.memory_space<any>>
    %226 = tpu.memref_slice %arg8[%c6_i32_160] : memref<8x!tpu.dma_semaphore, #tpu.memory_space<semaphore_mem>> -> memref<1x!tpu.dma_semaphore, #tpu.memory_space<semaphore_mem>>
    %227 = tpu.memref_squeeze %226 : memref<1x!tpu.dma_semaphore, #tpu.memory_space<semaphore_mem>> -> memref<!tpu.dma_semaphore, #tpu.memory_space<semaphore_mem>>
    tpu.wait_dma2 semaphore(%227 : memref<!tpu.dma_semaphore, #tpu.memory_space<semaphore_mem>>) src(%224 : memref<1x16xf32, #tpu.memory_space<vmem>>) dst(%225 : memref<1x16xf32, #tpu.memory_space<any>>)
    %c7_i32_164 = arith.constant 7 : i32
    %c7_i32_165 = arith.constant 7 : i32
    %c0_i32_166 = arith.constant 0 : i32
    %228 = tpu.memref_slice %arg6[%c7_i32_165, %c0_i32_166] : memref<8x16xf32, #tpu.memory_space<vmem>> -> memref<1x16xf32, #tpu.memory_space<vmem>>
    %c0_i32_167 = arith.constant 0 : i32
    %229 = tpu.memref_slice %arg4[%182, %c0_i32_167] : memref<64x16xf32, #tpu.memory_space<any>> -> memref<1x16xf32, #tpu.memory_space<any>>
    %230 = tpu.memref_slice %arg8[%c7_i32_164] : memref<8x!tpu.dma_semaphore, #tpu.memory_space<semaphore_mem>> -> memref<1x!tpu.dma_semaphore, #tpu.memory_space<semaphore_mem>>
    %231 = tpu.memref_squeeze %230 : memref<1x!tpu.dma_semaphore, #tpu.memory_space<semaphore_mem>> -> memref<!tpu.dma_semaphore, #tpu.memory_space<semaphore_mem>>
    tpu.wait_dma2 semaphore(%231 : memref<!tpu.dma_semaphore, #tpu.memory_space<semaphore_mem>>) src(%228 : memref<1x16xf32, #tpu.memory_space<vmem>>) dst(%229 : memref<1x16xf32, #tpu.memory_space<any>>)
    return
  }
  func.func @transform_0(%arg0: i32, %arg1: memref<8xi32, #tpu.memory_space<smem>>) -> (i32, i32) {
    %c0_i32 = arith.constant 0 : i32
    %c0_i32_0 = arith.constant 0 : i32
    return %arg0, %c0_i32 : i32, i32
  }
  func.func @transform_3(%arg0: i32, %arg1: memref<8xi32, #tpu.memory_space<smem>>) -> (i32, i32) {
    %c0_i32 = arith.constant 0 : i32
    %c0_i32_0 = arith.constant 0 : i32
    return %arg0, %c0_i32 : i32, i32
  }
}

</mosaic_0001>

<llo_original>
// kernel: elr_loss.1
$region0: #{elr_loss.1}
  #allocation0 [shape = 'u32[]', space=smem, size = 0x4, offset = 0x4, fixed_abs, tag = 'smem constant byte address 0x4 - core index']
  #allocation1 [shape = 'u32[144,128]{1,0:T(1,128)}', space=vmem, size = 0x12000, scoped, tag = 'internal scratch']
  #allocation2 [shape = 'f32[8,16]{1,0:T(8,128)}', space=vmem, size = 0x1000, scoped, tag = 'scratch operand']
  #allocation3 [shape = 's32[8]{0}', space=sflag, size = 0x20, scoped, tag = 'scratch operand']
  #allocation4 [shape = 's32[8]{0}', space=sflag, size = 0x20, scoped, tag = 'scratch operand']
  #allocation5 [shape = 's32[1]{0}', space=sflag, size = 0x4, scoped, tag = 'scoped memory for elr_loss.1']
  #allocation6 [shape = 'u8[512]{0}', space=smem, size = 0x200, scoped, tag = 'prefetched SMEM operand 0']
  #allocation9 [shape = 's32[]', space=sflag, size = 0x4, offset = 0, fixed_abs, tag = 'sflag constant byte address 0x0 - dummy sync flag']
  #allocation10 [shape = 's32[]', space=sflag, size = 0x4, offset = 0, fixed_abs, tag = 'sflag constant byte address 0x0 - dummy sync flag']
  #allocation11 [shape = 's32[]', space=sflag, size = 0x4, offset = 0, fixed_abs, tag = 'sflag constant byte address 0x0 - dummy sync flag']
  #allocation12 [shape = 's32[]', space=sflag, size = 0x4, offset = 0, fixed_abs, tag = 'sflag constant byte address 0x0 - dummy sync flag']
  #allocation13 [shape = 's32[]', space=sflag, size = 0x4, offset = 0, fixed_abs, tag = 'sflag constant byte address 0x0 - dummy sync flag']
  #allocation14 [shape = 's32[]', space=sflag, size = 0x4, offset = 0, fixed_abs, tag = 'sflag constant byte address 0x0 - dummy sync flag']
  #allocation15 [shape = 's32[]', space=sflag, size = 0x4, offset = 0, fixed_abs, tag = 'sflag constant byte address 0x0 - dummy sync flag']
  #allocation16 [shape = 's32[]', space=sflag, size = 0x4, offset = 0, fixed_abs, tag = 'sflag constant byte address 0x0 - dummy sync flag']
  #allocation17 [shape = 's32[]', space=sflag, size = 0x4, offset = 0, fixed_abs, tag = 'sflag constant byte address 0x0 - dummy sync flag']
  #allocation18 [shape = 's32[]', space=sflag, size = 0x4, offset = 0, fixed_abs, tag = 'sflag constant byte address 0x0 - dummy sync flag']
  #allocation19 [shape = 's32[]', space=sflag, size = 0x4, offset = 0, fixed_abs, tag = 'sflag constant byte address 0x0 - dummy sync flag']
  #allocation20 [shape = 's32[]', space=sflag, size = 0x4, offset = 0, fixed_abs, tag = 'sflag constant byte address 0x0 - dummy sync flag']
  #allocation21 [shape = 's32[]', space=sflag, size = 0x4, offset = 0, fixed_abs, tag = 'sflag constant byte address 0x0 - dummy sync flag']
  #allocation22 [shape = 's32[]', space=sflag, size = 0x4, offset = 0, fixed_abs, tag = 'sflag constant byte address 0x0 - dummy sync flag']
  #allocation23 [shape = 's32[]', space=sflag, size = 0x4, offset = 0, fixed_abs, tag = 'sflag constant byte address 0x0 - dummy sync flag']
  #allocation24 [shape = 's32[]', space=sflag, size = 0x4, offset = 0, fixed_abs, tag = 'sflag constant byte address 0x0 - dummy sync flag']
  %s0 = inlined_call_operand.vmem [shape: s32[8], index: 0, kind: input, shape index: {}]
  %s1 = inlined_call_operand.vmem [shape: f32[8,16], index: 1, kind: input, shape index: {}]
  %s2 = inlined_call_operand.vmem [shape: f32[64,16], index: 2, kind: input, shape index: {}, may-alias: {2,3}]
  %s3 = inlined_call_operand.vmem [shape: f32[64,16], index: 3, kind: output, shape index: {0}, may-alias: {2,3}]
  %s4 = inlined_call_operand.hbm [shape: f32[1,128], index: 4, kind: output, shape index: {1}]
  %5 = xla_tuple %s3, %s4
  %s6 = sld [smem:[#allocation0]]
  $region494: #{elr_loss.1} parent=0
    _
  %s8 = ssub.s32 1, %s6
  %s9 = scalar_select 0, %s8, %s6
  %s10 = sshll.u32 %s0, 4
  %s11 = int_to_ptr.vmem [resolvable:$true] %s10
  %13 = dma.vmem_to_smem %s11, 16, [#allocation6], [#allocation5]
  %14 = dma.done [#allocation5], 16
  %15 = sfence
  $region1: #{elr_loss.1} parent=0
    #allocation7 [shape = 'u8[512]{0}', space=vmem, size = 0x400, scoped, tag = 'output window, operand 1, single buffered']
    #allocation8 [shape = 's32[1]{0}', space=sflag, size = 0x4, scoped, tag = 'scoped memory for elr_loss.1']
    %16 = vsyncpa [#allocation8], 0
    // Predicated region
    $region2: #{elr_loss.1} parent=1 // pred_check
      _
    $region3: #{elr_loss.1} parent=1 // pred_check_branch
      %18 = sbr.rel (0) target = $region5
    $region4: #{elr_loss.1} parent=1 // pred_region
      _
    $region5: #{elr_loss.1} parent=1 // pred_fallthru
      _
    %s19 = smul.u32 0, 8
    %s20 = sld [smem:[#allocation6 + %s19]]
    %s21 = scalar_lea.vmem %s2, %s20
    %p23 = scmp.lt.u32.totalorder 1, 8
    %p24 = pneg %p23
    // Predicated region
    $region6: #{elr_loss.1} parent=1 // pred_check
      _
    $region7: #{elr_loss.1} parent=1 // pred_check_branch
      %26 = sbr.rel (%p23) target = $region9
    $region8: #{elr_loss.1} parent=1 // pred_region
      %s41 = sand.u32 1, 7
      %p42 = scmp.eq.s32.totalorder %s41, 0
      %p43 = pneg %p42
      // Predicated region
      $region21: #{elr_loss.1} parent=8 // pred_check
        _
      $region22: #{elr_loss.1} parent=8 // pred_check_branch
        %45 = sbr.rel (%p42) target = $region24
      $region23: #{elr_loss.1} parent=8 // pred_region
        %s46 = sand.u32 1, 7
        %s47 = ssub.s32 1, %s46
        %s48 = scalar_lea.vmem %s21, %s47
        %s49 = ssub.s32 1, %s46
        %s50 = scalar_lea.vmem [#allocation2], %s49
        %s51 = sshllo.u32 0, %s46
        loop: start=0, step=1, limit=1
        $region25: #{elr_loss.1} parent=23 // loop_pre_header
          _
        $region26: #{elr_loss.1} parent=23 // loop_header
          %s53 = sphi 0, %s57
          %p54 = scmp.ge.s32.totalorder %s53, 1
          %s58 = sphi %s48, %s48
          %s59 = sphi %s50, %s50
        $region27: #{elr_loss.1} parent=23 // loop_header_branch
          %56 = sbr.rel (%p54) target = $region31
        $region28: #{elr_loss.1} parent=23 // loop_body
          %v60 = vld [vmem:[%s58] sm:%s51]
          %61 = vst [vmem:[%s59] sm:%s51] %v60
        $region29: #{elr_loss.1} parent=23 // loop_footer
          %s57 = sadd.s32 1, %s53
        $region30: #{elr_loss.1} parent=23 // loop_footer_branch
          %52 = sbr.rel target = $region26
        $region31: #{elr_loss.1} parent=23 // loop_exit
          _
      $region24: #{elr_loss.1} parent=8 // pred_fallthru
        _
    $region9: #{elr_loss.1} parent=1 // pred_fallthru
      _
    // Predicated region
    $region10: #{elr_loss.1} parent=1 // pred_check
      %p27 = pneg %p23
    $region11: #{elr_loss.1} parent=1 // pred_check_branch
      %29 = sbr.rel (%p27) target = $region13
    $region12: #{elr_loss.1} parent=1 // pred_region
      %s30 = sshllo.u32 0, 1
      loop: start=0, step=1, limit=1
      $region14: #{elr_loss.1} parent=12 // loop_pre_header
        _
      $region15: #{elr_loss.1} parent=12 // loop_header
        %s32 = sphi 0, %s36
        %p33 = scmp.ge.s32.totalorder %s32, 1
        %s37 = sphi %s21, %s21
        %s38 = sphi [#allocation2], [#allocation2]
      $region16: #{elr_loss.1} parent=12 // loop_header_branch
        %35 = sbr.rel (%p33) target = $region20
      $region17: #{elr_loss.1} parent=12 // loop_body
        %v39 = vld [vmem:[%s37] sm:%s30]
        %40 = vst [vmem:[%s38] sm:%s30] %v39
      $region18: #{elr_loss.1} parent=12 // loop_footer
        %s36 = sadd.s32 1, %s32
      $region19: #{elr_loss.1} parent=12 // loop_footer_branch
        %31 = sbr.rel target = $region15
      $region20: #{elr_loss.1} parent=12 // loop_exit
        _
    $region13: #{elr_loss.1} parent=1 // pred_fallthru
      _
    // Predicated region
    $region32: #{elr_loss.1} parent=1 // pred_check
      _
    $region33: #{elr_loss.1} parent=1 // pred_check_branch
      %64 = sbr.rel (0) target = $region35
    $region34: #{elr_loss.1} parent=1 // pred_region
      %65 = vsyncadd [#allocation3], 16
    $region35: #{elr_loss.1} parent=1 // pred_fallthru
      _
    %s66 = sadd.s32 %s19, 1
    %s67 = sld [smem:[#allocation6 + %s66]]
    %s68 = scalar_lea.vmem %s2, %s67
    %s69 = scalar_lea.vmem [#allocation2], 1
    %s70 = scalar_lea.sflag [#allocation3], 1
    %p72 = scmp.lt.u32.totalorder 1, 8
    %p73 = pneg %p72
    // Predicated region
    $region36: #{elr_loss.1} parent=1 // pred_check
      _
    $region37: #{elr_loss.1} parent=1 // pred_check_branch
      %75 = sbr.rel (%p72) target = $region39
    $region38: #{elr_loss.1} parent=1 // pred_region
      %s90 = sand.u32 1, 7
      %p91 = scmp.eq.s32.totalorder %s90, 0
      %p92 = pneg %p91
      // Predicated region
      $region51: #{elr_loss.1} parent=38 // pred_check
        _
      $region52: #{elr_loss.1} parent=38 // pred_check_branch
        %94 = sbr.rel (%p91) target = $region54
      $region53: #{elr_loss.1} parent=38 // pred_region
        %s95 = sand.u32 1, 7
        %s96 = ssub.s32 1, %s95
        %s97 = scalar_lea.vmem %s68, %s96
        %s98 = ssub.s32 1, %s95
        %s99 = scalar_lea.vmem %s69, %s98 [#allocation2]
        %s100 = sshllo.u32 0, %s95
        loop: start=0, step=1, limit=1
        $region55: #{elr_loss.1} parent=53 // loop_pre_header
          _
        $region56: #{elr_loss.1} parent=53 // loop_header
          %s102 = sphi 0, %s106
          %p103 = scmp.ge.s32.totalorder %s102, 1
          %s107 = sphi %s97, %s97
          %s108 = sphi %s99, %s99
        $region57: #{elr_loss.1} parent=53 // loop_header_branch
          %105 = sbr.rel (%p103) target = $region61
        $region58: #{elr_loss.1} parent=53 // loop_body
          %v109 = vld [vmem:[%s107] sm:%s100]
          %110 = vst [vmem:[%s108] sm:%s100] %v109
        $region59: #{elr_loss.1} parent=53 // loop_footer
          %s106 = sadd.s32 1, %s102
        $region60: #{elr_loss.1} parent=53 // loop_footer_branch
          %101 = sbr.rel target = $region56
        $region61: #{elr_loss.1} parent=53 // loop_exit
          _
      $region54: #{elr_loss.1} parent=38 // pred_fallthru
        _
    $region39: #{elr_loss.1} parent=1 // pred_fallthru
      _
    // Predicated region
    $region40: #{elr_loss.1} parent=1 // pred_check
      %p76 = pneg %p72
    $region41: #{elr_loss.1} parent=1 // pred_check_branch
      %78 = sbr.rel (%p76) target = $region43
    $region42: #{elr_loss.1} parent=1 // pred_region
      %s79 = sshllo.u32 0, 1
      loop: start=0, step=1, limit=1
      $region44: #{elr_loss.1} parent=42 // loop_pre_header
        _
      $region45: #{elr_loss.1} parent=42 // loop_header
        %s81 = sphi 0, %s85
        %p82 = scmp.ge.s32.totalorder %s81, 1
        %s86 = sphi %s68, %s68
        %s87 = sphi %s69, %s69
      $region46: #{elr_loss.1} parent=42 // loop_header_branch
        %84 = sbr.rel (%p82) target = $region50
      $region47: #{elr_loss.1} parent=42 // loop_body
        %v88 = vld [vmem:[%s86] sm:%s79]
        %89 = vst [vmem:[%s87] sm:%s79] %v88
      $region48: #{elr_loss.1} parent=42 // loop_footer
        %s85 = sadd.s32 1, %s81
      $region49: #{elr_loss.1} parent=42 // loop_footer_branch
        %80 = sbr.rel target = $region45
      $region50: #{elr_loss.1} parent=42 // loop_exit
        _
    $region43: #{elr_loss.1} parent=1 // pred_fallthru
      _
    // Predicated region
    $region62: #{elr_loss.1} parent=1 // pred_check
      _
    $region63: #{elr_loss.1} parent=1 // pred_check_branch
      %113 = sbr.rel (0) target = $region65
    $region64: #{elr_loss.1} parent=1 // pred_region
      %114 = vsyncadd %s70, 16
    $region65: #{elr_loss.1} parent=1 // pred_fallthru
      _
    %s115 = sadd.s32 %s19, 2
    %s116 = sld [smem:[#allocation6 + %s115]]
    %s117 = scalar_lea.vmem %s2, %s116
    %s118 = scalar_lea.vmem [#allocation2], 2
    %s119 = scalar_lea.sflag [#allocation3], 2
    %p121 = scmp.lt.u32.totalorder 1, 8
    %p122 = pneg %p121
    // Predicated region
    $region66: #{elr_loss.1} parent=1 // pred_check
      _
    $region67: #{elr_loss.1} parent=1 // pred_check_branch
      %124 = sbr.rel (%p121) target = $region69
    $region68: #{elr_loss.1} parent=1 // pred_region
      %s139 = sand.u32 1, 7
      %p140 = scmp.eq.s32.totalorder %s139, 0
      %p141 = pneg %p140
      // Predicated region
      $region81: #{elr_loss.1} parent=68 // pred_check
        _
      $region82: #{elr_loss.1} parent=68 // pred_check_branch
        %143 = sbr.rel (%p140) target = $region84
      $region83: #{elr_loss.1} parent=68 // pred_region
        %s144 = sand.u32 1, 7
        %s145 = ssub.s32 1, %s144
        %s146 = scalar_lea.vmem %s117, %s145
        %s147 = ssub.s32 1, %s144
        %s148 = scalar_lea.vmem %s118, %s147 [#allocation2]
        %s149 = sshllo.u32 0, %s144
        loop: start=0, step=1, limit=1
        $region85: #{elr_loss.1} parent=83 // loop_pre_header
          _
        $region86: #{elr_loss.1} parent=83 // loop_header
          %s151 = sphi 0, %s155
          %p152 = scmp.ge.s32.totalorder %s151, 1
          %s156 = sphi %s146, %s146
          %s157 = sphi %s148, %s148
        $region87: #{elr_loss.1} parent=83 // loop_header_branch
          %154 = sbr.rel (%p152) target = $region91
        $region88: #{elr_loss.1} parent=83 // loop_body
          %v158 = vld [vmem:[%s156] sm:%s149]
          %159 = vst [vmem:[%s157] sm:%s149] %v158
        $region89: #{elr_loss.1} parent=83 // loop_footer
          %s155 = sadd.s32 1, %s151
        $region90: #{elr_loss.1} parent=83 // loop_footer_branch
          %150 = sbr.rel target = $region86
        $region91: #{elr_loss.1} parent=83 // loop_exit
          _
      $region84: #{elr_loss.1} parent=68 // pred_fallthru
        _
    $region69: #{elr_loss.1} parent=1 // pred_fallthru
      _
    // Predicated region
    $region70: #{elr_loss.1} parent=1 // pred_check
      %p125 = pneg %p121
    $region71: #{elr_loss.1} parent=1 // pred_check_branch
      %127 = sbr.rel (%p125) target = $region73
    $region72: #{elr_loss.1} parent=1 // pred_region
      %s128 = sshllo.u32 0, 1
      loop: start=0, step=1, limit=1
      $region74: #{elr_loss.1} parent=72 // loop_pre_header
        _
      $region75: #{elr_loss.1} parent=72 // loop_header
        %s130 = sphi 0, %s134
        %p131 = scmp.ge.s32.totalorder %s130, 1
        %s135 = sphi %s117, %s117
        %s136 = sphi %s118, %s118
      $region76: #{elr_loss.1} parent=72 // loop_header_branch
        %133 = sbr.rel (%p131) target = $region80
      $region77: #{elr_loss.1} parent=72 // loop_body
        %v137 = vld [vmem:[%s135] sm:%s128]
        %138 = vst [vmem:[%s136] sm:%s128] %v137
      $region78: #{elr_loss.1} parent=72 // loop_footer
        %s134 = sadd.s32 1, %s130
      $region79: #{elr_loss.1} parent=72 // loop_footer_branch
        %129 = sbr.rel target = $region75
      $region80: #{elr_loss.1} parent=72 // loop_exit
        _
    $region73: #{elr_loss.1} parent=1 // pred_fallthru
      _
    // Predicated region
    $region92: #{elr_loss.1} parent=1 // pred_check
      _
    $region93: #{elr_loss.1} parent=1 // pred_check_branch
      %162 = sbr.rel (0) target = $region95
    $region94: #{elr_loss.1} parent=1 // pred_region
      %163 = vsyncadd %s119, 16
    $region95: #{elr_loss.1} parent=1 // pred_fallthru
      _
    %s164 = sadd.s32 %s19, 3
    %s165 = sld [smem:[#allocation6 + %s164]]
    %s166 = scalar_lea.vmem %s2, %s165
    %s167 = scalar_lea.vmem [#allocation2], 3
    %s168 = scalar_lea.sflag [#allocation3], 3
    %p170 = scmp.lt.u32.totalorder 1, 8
    %p171 = pneg %p170
    // Predicated region
    $region96: #{elr_loss.1} parent=1 // pred_check
      _
    $region97: #{elr_loss.1} parent=1 // pred_check_branch
      %173 = sbr.rel (%p170) target = $region99
    $region98: #{elr_loss.1} parent=1 // pred_region
      %s188 = sand.u32 1, 7
      %p189 = scmp.eq.s32.totalorder %s188, 0
      %p190 = pneg %p189
      // Predicated region
      $region111: #{elr_loss.1} parent=98 // pred_check
        _
      $region112: #{elr_loss.1} parent=98 // pred_check_branch
        %192 = sbr.rel (%p189) target = $region114
      $region113: #{elr_loss.1} parent=98 // pred_region
        %s193 = sand.u32 1, 7
        %s194 = ssub.s32 1, %s193
        %s195 = scalar_lea.vmem %s166, %s194
        %s196 = ssub.s32 1, %s193
        %s197 = scalar_lea.vmem %s167, %s196 [#allocation2]
        %s198 = sshllo.u32 0, %s193
        loop: start=0, step=1, limit=1
        $region115: #{elr_loss.1} parent=113 // loop_pre_header
          _
        $region116: #{elr_loss.1} parent=113 // loop_header
          %s200 = sphi 0, %s204
          %p201 = scmp.ge.s32.totalorder %s200, 1
          %s205 = sphi %s195, %s195
          %s206 = sphi %s197, %s197
        $region117: #{elr_loss.1} parent=113 // loop_header_branch
          %203 = sbr.rel (%p201) target = $region121
        $region118: #{elr_loss.1} parent=113 // loop_body
          %v207 = vld [vmem:[%s205] sm:%s198]
          %208 = vst [vmem:[%s206] sm:%s198] %v207
        $region119: #{elr_loss.1} parent=113 // loop_footer
          %s204 = sadd.s32 1, %s200
        $region120: #{elr_loss.1} parent=113 // loop_footer_branch
          %199 = sbr.rel target = $region116
        $region121: #{elr_loss.1} parent=113 // loop_exit
          _
      $region114: #{elr_loss.1} parent=98 // pred_fallthru
        _
    $region99: #{elr_loss.1} parent=1 // pred_fallthru
      _
    // Predicated region
    $region100: #{elr_loss.1} parent=1 // pred_check
      %p174 = pneg %p170
    $region101: #{elr_loss.1} parent=1 // pred_check_branch
      %176 = sbr.rel (%p174) target = $region103
    $region102: #{elr_loss.1} parent=1 // pred_region
      %s177 = sshllo.u32 0, 1
      loop: start=0, step=1, limit=1
      $region104: #{elr_loss.1} parent=102 // loop_pre_header
        _
      $region105: #{elr_loss.1} parent=102 // loop_header
        %s179 = sphi 0, %s183
        %p180 = scmp.ge.s32.totalorder %s179, 1
        %s184 = sphi %s166, %s166
        %s185 = sphi %s167, %s167
      $region106: #{elr_loss.1} parent=102 // loop_header_branch
        %182 = sbr.rel (%p180) target = $region110
      $region107: #{elr_loss.1} parent=102 // loop_body
        %v186 = vld [vmem:[%s184] sm:%s177]
        %187 = vst [vmem:[%s185] sm:%s177] %v186
      $region108: #{elr_loss.1} parent=102 // loop_footer
        %s183 = sadd.s32 1, %s179
      $region109: #{elr_loss.1} parent=102 // loop_footer_branch
        %178 = sbr.rel target = $region105
      $region110: #{elr_loss.1} parent=102 // loop_exit
        _
    $region103: #{elr_loss.1} parent=1 // pred_fallthru
      _
    // Predicated region
    $region122: #{elr_loss.1} parent=1 // pred_check
      _
    $region123: #{elr_loss.1} parent=1 // pred_check_branch
      %211 = sbr.rel (0) target = $region125
    $region124: #{elr_loss.1} parent=1 // pred_region
      %212 = vsyncadd %s168, 16
    $region125: #{elr_loss.1} parent=1 // pred_fallthru
      _
    %s213 = sadd.s32 %s19, 4
    %s214 = sld [smem:[#allocation6 + %s213]]
    %s215 = scalar_lea.vmem %s2, %s214
    %s216 = scalar_lea.vmem [#allocation2], 4
    %s217 = scalar_lea.sflag [#allocation3], 4
    %p219 = scmp.lt.u32.totalorder 1, 8
    %p220 = pneg %p219
    // Predicated region
    $region126: #{elr_loss.1} parent=1 // pred_check
      _
    $region127: #{elr_loss.1} parent=1 // pred_check_branch
      %222 = sbr.rel (%p219) target = $region129
    $region128: #{elr_loss.1} parent=1 // pred_region
      %s237 = sand.u32 1, 7
      %p238 = scmp.eq.s32.totalorder %s237, 0
      %p239 = pneg %p238
      // Predicated region
      $region141: #{elr_loss.1} parent=128 // pred_check
        _
      $region142: #{elr_loss.1} parent=128 // pred_check_branch
        %241 = sbr.rel (%p238) target = $region144
      $region143: #{elr_loss.1} parent=128 // pred_region
        %s242 = sand.u32 1, 7
        %s243 = ssub.s32 1, %s242
        %s244 = scalar_lea.vmem %s215, %s243
        %s245 = ssub.s32 1, %s242
        %s246 = scalar_lea.vmem %s216, %s245 [#allocation2]
        %s247 = sshllo.u32 0, %s242
        loop: start=0, step=1, limit=1
        $region145: #{elr_loss.1} parent=143 // loop_pre_header
          _
        $region146: #{elr_loss.1} parent=143 // loop_header
          %s249 = sphi 0, %s253
          %p250 = scmp.ge.s32.totalorder %s249, 1
          %s254 = sphi %s244, %s244
          %s255 = sphi %s246, %s246
        $region147: #{elr_loss.1} parent=143 // loop_header_branch
          %252 = sbr.rel (%p250) target = $region151
        $region148: #{elr_loss.1} parent=143 // loop_body
          %v256 = vld [vmem:[%s254] sm:%s247]
          %257 = vst [vmem:[%s255] sm:%s247] %v256
        $region149: #{elr_loss.1} parent=143 // loop_footer
          %s253 = sadd.s32 1, %s249
        $region150: #{elr_loss.1} parent=143 // loop_footer_branch
          %248 = sbr.rel target = $region146
        $region151: #{elr_loss.1} parent=143 // loop_exit
          _
      $region144: #{elr_loss.1} parent=128 // pred_fallthru
        _
    $region129: #{elr_loss.1} parent=1 // pred_fallthru
      _
    // Predicated region
    $region130: #{elr_loss.1} parent=1 // pred_check
      %p223 = pneg %p219
    $region131: #{elr_loss.1} parent=1 // pred_check_branch
      %225 = sbr.rel (%p223) target = $region133
    $region132: #{elr_loss.1} parent=1 // pred_region
      %s226 = sshllo.u32 0, 1
      loop: start=0, step=1, limit=1
      $region134: #{elr_loss.1} parent=132 // loop_pre_header
        _
      $region135: #{elr_loss.1} parent=132 // loop_header
        %s228 = sphi 0, %s232
        %p229 = scmp.ge.s32.totalorder %s228, 1
        %s233 = sphi %s215, %s215
        %s234 = sphi %s216, %s216
      $region136: #{elr_loss.1} parent=132 // loop_header_branch
        %231 = sbr.rel (%p229) target = $region140
      $region137: #{elr_loss.1} parent=132 // loop_body
        %v235 = vld [vmem:[%s233] sm:%s226]
        %236 = vst [vmem:[%s234] sm:%s226] %v235
      $region138: #{elr_loss.1} parent=132 // loop_footer
        %s232 = sadd.s32 1, %s228
      $region139: #{elr_loss.1} parent=132 // loop_footer_branch
        %227 = sbr.rel target = $region135
      $region140: #{elr_loss.1} parent=132 // loop_exit
        _
    $region133: #{elr_loss.1} parent=1 // pred_fallthru
      _
    // Predicated region
    $region152: #{elr_loss.1} parent=1 // pred_check
      _
    $region153: #{elr_loss.1} parent=1 // pred_check_branch
      %260 = sbr.rel (0) target = $region155
    $region154: #{elr_loss.1} parent=1 // pred_region
      %261 = vsyncadd %s217, 16
    $region155: #{elr_loss.1} parent=1 // pred_fallthru
      _
    %s262 = sadd.s32 %s19, 5
    %s263 = sld [smem:[#allocation6 + %s262]]
    %s264 = scalar_lea.vmem %s2, %s263
    %s265 = scalar_lea.vmem [#allocation2], 5
    %s266 = scalar_lea.sflag [#allocation3], 5
    %p268 = scmp.lt.u32.totalorder 1, 8
    %p269 = pneg %p268
    // Predicated region
    $region156: #{elr_loss.1} parent=1 // pred_check
      _
    $region157: #{elr_loss.1} parent=1 // pred_check_branch
      %271 = sbr.rel (%p268) target = $region159
    $region158: #{elr_loss.1} parent=1 // pred_region
      %s286 = sand.u32 1, 7
      %p287 = scmp.eq.s32.totalorder %s286, 0
      %p288 = pneg %p287
      // Predicated region
      $region171: #{elr_loss.1} parent=158 // pred_check
        _
      $region172: #{elr_loss.1} parent=158 // pred_check_branch
        %290 = sbr.rel (%p287) target = $region174
      $region173: #{elr_loss.1} parent=158 // pred_region
        %s291 = sand.u32 1, 7
        %s292 = ssub.s32 1, %s291
        %s293 = scalar_lea.vmem %s264, %s292
        %s294 = ssub.s32 1, %s291
        %s295 = scalar_lea.vmem %s265, %s294 [#allocation2]
        %s296 = sshllo.u32 0, %s291
        loop: start=0, step=1, limit=1
        $region175: #{elr_loss.1} parent=173 // loop_pre_header
          _
        $region176: #{elr_loss.1} parent=173 // loop_header
          %s298 = sphi 0, %s302
          %p299 = scmp.ge.s32.totalorder %s298, 1
          %s303 = sphi %s293, %s293
          %s304 = sphi %s295, %s295
        $region177: #{elr_loss.1} parent=173 // loop_header_branch
          %301 = sbr.rel (%p299) target = $region181
        $region178: #{elr_loss.1} parent=173 // loop_body
          %v305 = vld [vmem:[%s303] sm:%s296]
          %306 = vst [vmem:[%s304] sm:%s296] %v305
        $region179: #{elr_loss.1} parent=173 // loop_footer
          %s302 = sadd.s32 1, %s298
        $region180: #{elr_loss.1} parent=173 // loop_footer_branch
          %297 = sbr.rel target = $region176
        $region181: #{elr_loss.1} parent=173 // loop_exit
          _
      $region174: #{elr_loss.1} parent=158 // pred_fallthru
        _
    $region159: #{elr_loss.1} parent=1 // pred_fallthru
      _
    // Predicated region
    $region160: #{elr_loss.1} parent=1 // pred_check
      %p272 = pneg %p268
    $region161: #{elr_loss.1} parent=1 // pred_check_branch
      %274 = sbr.rel (%p272) target = $region163
    $region162: #{elr_loss.1} parent=1 // pred_region
      %s275 = sshllo.u32 0, 1
      loop: start=0, step=1, limit=1
      $region164: #{elr_loss.1} parent=162 // loop_pre_header
        _
      $region165: #{elr_loss.1} parent=162 // loop_header
        %s277 = sphi 0, %s281
        %p278 = scmp.ge.s32.totalorder %s277, 1
        %s282 = sphi %s264, %s264
        %s283 = sphi %s265, %s265
      $region166: #{elr_loss.1} parent=162 // loop_header_branch
        %280 = sbr.rel (%p278) target = $region170
      $region167: #{elr_loss.1} parent=162 // loop_body
        %v284 = vld [vmem:[%s282] sm:%s275]
        %285 = vst [vmem:[%s283] sm:%s275] %v284
      $region168: #{elr_loss.1} parent=162 // loop_footer
        %s281 = sadd.s32 1, %s277
      $region169: #{elr_loss.1} parent=162 // loop_footer_branch
        %276 = sbr.rel target = $region165
      $region170: #{elr_loss.1} parent=162 // loop_exit
        _
    $region163: #{elr_loss.1} parent=1 // pred_fallthru
      _
    // Predicated region
    $region182: #{elr_loss.1} parent=1 // pred_check
      _
    $region183: #{elr_loss.1} parent=1 // pred_check_branch
      %309 = sbr.rel (0) target = $region185
    $region184: #{elr_loss.1} parent=1 // pred_region
      %310 = vsyncadd %s266, 16
    $region185: #{elr_loss.1} parent=1 // pred_fallthru
      _
    %s311 = sadd.s32 %s19, 6
    %s312 = sld [smem:[#allocation6 + %s311]]
    %s313 = scalar_lea.vmem %s2, %s312
    %s314 = scalar_lea.vmem [#allocation2], 6
    %s315 = scalar_lea.sflag [#allocation3], 6
    %p317 = scmp.lt.u32.totalorder 1, 8
    %p318 = pneg %p317
    // Predicated region
    $region186: #{elr_loss.1} parent=1 // pred_check
      _
    $region187: #{elr_loss.1} parent=1 // pred_check_branch
      %320 = sbr.rel (%p317) target = $region189
    $region188: #{elr_loss.1} parent=1 // pred_region
      %s335 = sand.u32 1, 7
      %p336 = scmp.eq.s32.totalorder %s335, 0
      %p337 = pneg %p336
      // Predicated region
      $region201: #{elr_loss.1} parent=188 // pred_check
        _
      $region202: #{elr_loss.1} parent=188 // pred_check_branch
        %339 = sbr.rel (%p336) target = $region204
      $region203: #{elr_loss.1} parent=188 // pred_region
        %s340 = sand.u32 1, 7
        %s341 = ssub.s32 1, %s340
        %s342 = scalar_lea.vmem %s313, %s341
        %s343 = ssub.s32 1, %s340
        %s344 = scalar_lea.vmem %s314, %s343 [#allocation2]
        %s345 = sshllo.u32 0, %s340
        loop: start=0, step=1, limit=1
        $region205: #{elr_loss.1} parent=203 // loop_pre_header
          _
        $region206: #{elr_loss.1} parent=203 // loop_header
          %s347 = sphi 0, %s351
          %p348 = scmp.ge.s32.totalorder %s347, 1
          %s352 = sphi %s342, %s342
          %s353 = sphi %s344, %s344
        $region207: #{elr_loss.1} parent=203 // loop_header_branch
          %350 = sbr.rel (%p348) target = $region211
        $region208: #{elr_loss.1} parent=203 // loop_body
          %v354 = vld [vmem:[%s352] sm:%s345]
          %355 = vst [vmem:[%s353] sm:%s345] %v354
        $region209: #{elr_loss.1} parent=203 // loop_footer
          %s351 = sadd.s32 1, %s347
        $region210: #{elr_loss.1} parent=203 // loop_footer_branch
          %346 = sbr.rel target = $region206
        $region211: #{elr_loss.1} parent=203 // loop_exit
          _
      $region204: #{elr_loss.1} parent=188 // pred_fallthru
        _
    $region189: #{elr_loss.1} parent=1 // pred_fallthru
      _
    // Predicated region
    $region190: #{elr_loss.1} parent=1 // pred_check
      %p321 = pneg %p317
    $region191: #{elr_loss.1} parent=1 // pred_check_branch
      %323 = sbr.rel (%p321) target = $region193
    $region192: #{elr_loss.1} parent=1 // pred_region
      %s324 = sshllo.u32 0, 1
      loop: start=0, step=1, limit=1
      $region194: #{elr_loss.1} parent=192 // loop_pre_header
        _
      $region195: #{elr_loss.1} parent=192 // loop_header
        %s326 = sphi 0, %s330
        %p327 = scmp.ge.s32.totalorder %s326, 1
        %s331 = sphi %s313, %s313
        %s332 = sphi %s314, %s314
      $region196: #{elr_loss.1} parent=192 // loop_header_branch
        %329 = sbr.rel (%p327) target = $region200
      $region197: #{elr_loss.1} parent=192 // loop_body
        %v333 = vld [vmem:[%s331] sm:%s324]
        %334 = vst [vmem:[%s332] sm:%s324] %v333
      $region198: #{elr_loss.1} parent=192 // loop_footer
        %s330 = sadd.s32 1, %s326
      $region199: #{elr_loss.1} parent=192 // loop_footer_branch
        %325 = sbr.rel target = $region195
      $region200: #{elr_loss.1} parent=192 // loop_exit
        _
    $region193: #{elr_loss.1} parent=1 // pred_fallthru
      _
    // Predicated region
    $region212: #{elr_loss.1} parent=1 // pred_check
      _
    $region213: #{elr_loss.1} parent=1 // pred_check_branch
      %358 = sbr.rel (0) target = $region215
    $region214: #{elr_loss.1} parent=1 // pred_region
      %359 = vsyncadd %s315, 16
    $region215: #{elr_loss.1} parent=1 // pred_fallthru
      _
    %s360 = sadd.s32 %s19, 7
    %s361 = sld [smem:[#allocation6 + %s360]]
    %s362 = scalar_lea.vmem %s2, %s361
    %s363 = scalar_lea.vmem [#allocation2], 7
    %s364 = scalar_lea.sflag [#allocation3], 7
    %p366 = scmp.lt.u32.totalorder 1, 8
    %p367 = pneg %p366
    // Predicated region
    $region216: #{elr_loss.1} parent=1 // pred_check
      _
    $region217: #{elr_loss.1} parent=1 // pred_check_branch
      %369 = sbr.rel (%p366) target = $region219
    $region218: #{elr_loss.1} parent=1 // pred_region
      %s384 = sand.u32 1, 7
      %p385 = scmp.eq.s32.totalorder %s384, 0
      %p386 = pneg %p385
      // Predicated region
      $region231: #{elr_loss.1} parent=218 // pred_check
        _
      $region232: #{elr_loss.1} parent=218 // pred_check_branch
        %388 = sbr.rel (%p385) target = $region234
      $region233: #{elr_loss.1} parent=218 // pred_region
        %s389 = sand.u32 1, 7
        %s390 = ssub.s32 1, %s389
        %s391 = scalar_lea.vmem %s362, %s390
        %s392 = ssub.s32 1, %s389
        %s393 = scalar_lea.vmem %s363, %s392 [#allocation2]
        %s394 = sshllo.u32 0, %s389
        loop: start=0, step=1, limit=1
        $region235: #{elr_loss.1} parent=233 // loop_pre_header
          _
        $region236: #{elr_loss.1} parent=233 // loop_header
          %s396 = sphi 0, %s400
          %p397 = scmp.ge.s32.totalorder %s396, 1
          %s401 = sphi %s391, %s391
          %s402 = sphi %s393, %s393
        $region237: #{elr_loss.1} parent=233 // loop_header_branch
          %399 = sbr.rel (%p397) target = $region241
        $region238: #{elr_loss.1} parent=233 // loop_body
          %v403 = vld [vmem:[%s401] sm:%s394]
          %404 = vst [vmem:[%s402] sm:%s394] %v403
        $region239: #{elr_loss.1} parent=233 // loop_footer
          %s400 = sadd.s32 1, %s396
        $region240: #{elr_loss.1} parent=233 // loop_footer_branch
          %395 = sbr.rel target = $region236
        $region241: #{elr_loss.1} parent=233 // loop_exit
          _
      $region234: #{elr_loss.1} parent=218 // pred_fallthru
        _
    $region219: #{elr_loss.1} parent=1 // pred_fallthru
      _
    // Predicated region
    $region220: #{elr_loss.1} parent=1 // pred_check
      %p370 = pneg %p366
    $region221: #{elr_loss.1} parent=1 // pred_check_branch
      %372 = sbr.rel (%p370) target = $region223
    $region222: #{elr_loss.1} parent=1 // pred_region
      %s373 = sshllo.u32 0, 1
      loop: start=0, step=1, limit=1
      $region224: #{elr_loss.1} parent=222 // loop_pre_header
        _
      $region225: #{elr_loss.1} parent=222 // loop_header
        %s375 = sphi 0, %s379
        %p376 = scmp.ge.s32.totalorder %s375, 1
        %s380 = sphi %s362, %s362
        %s381 = sphi %s363, %s363
      $region226: #{elr_loss.1} parent=222 // loop_header_branch
        %378 = sbr.rel (%p376) target = $region230
      $region227: #{elr_loss.1} parent=222 // loop_body
        %v382 = vld [vmem:[%s380] sm:%s373]
        %383 = vst [vmem:[%s381] sm:%s373] %v382
      $region228: #{elr_loss.1} parent=222 // loop_footer
        %s379 = sadd.s32 1, %s375
      $region229: #{elr_loss.1} parent=222 // loop_footer_branch
        %374 = sbr.rel target = $region225
      $region230: #{elr_loss.1} parent=222 // loop_exit
        _
    $region223: #{elr_loss.1} parent=1 // pred_fallthru
      _
    // Predicated region
    $region242: #{elr_loss.1} parent=1 // pred_check
      _
    $region243: #{elr_loss.1} parent=1 // pred_check_branch
      %407 = sbr.rel (0) target = $region245
    $region244: #{elr_loss.1} parent=1 // pred_region
      %408 = vsyncadd %s364, 16
    $region245: #{elr_loss.1} parent=1 // pred_fallthru
      _
    %v409 = vld [vmem:[%s1] sm:$0xff]
    %vm410 = vcmask 130048
    %v411 = vsel %vm410, %v409, -inf
    %412 = vmax.xlane.f32.xlu0 %v411
    %v413 = vpop.xlane.xlu0 %412
    %v414 = vsub.f32 %v409, %v413
    %v415 = vmul.f32 %v414, 1.442695
    %v416 = vpow.pop %v415
    %v417 = vsel %vm410, %v416, 0.0
    %418 = vadd.xlane.f32.xlu0 %v417
    %v419 = vpop.xlane.xlu0 %418
    %v420 = vrcp.pop %v419
    %v421 = vmul.f32 %v416, %v420
    %v422 = vmax.f32 %v421, 0.0001
    %v423 = vmin.f32 %v422, 0.9999
    %v424 = vsel %vm410, %v423, 0.0
    %425 = vadd.xlane.f32.xlu0 %v424
    %v426 = vpop.xlane.xlu0 %425
    %v427 = vrcp.pop %v426
    %v428 = vmul.f32 %v423, %v427
    %s429 = smul.u32 1, 1
    %s430 = sshll.u32 %s429, 4
    %431 = dma.done [#allocation3], %s430
    %s432 = sshll.u32 %s429, 4
    %433 = dma.done %s70, %s432
    %s434 = sshll.u32 %s429, 4
    %435 = dma.done %s119, %s434
    %s436 = sshll.u32 %s429, 4
    %437 = dma.done %s168, %s436
    %s438 = sshll.u32 %s429, 4
    %439 = dma.done %s217, %s438
    %s440 = sshll.u32 %s429, 4
    %441 = dma.done %s266, %s440
    %s442 = sshll.u32 %s429, 4
    %443 = dma.done %s315, %s442
    %s444 = sshll.u32 %s429, 4
    %445 = dma.done %s364, %s444
    %v446 = vld [vmem:[#allocation2] sm:$0xff]
    %v447 = vmul.f32 %v446, 0.6
    %v448 = vmul.f32 %v428, 0.4
    %v449 = vadd.f32 %v447, %v448
    %450 = vst.msk [vmem:[#allocation2] sm:$0xff] %vm410, %v449
    %s451 = sld [smem:[#allocation6 + %s19]]
    %s452 = scalar_lea.vmem %s3, %s451
    %p454 = scmp.lt.u32.totalorder 1, 8
    %p455 = pneg %p454
    // Predicated region
    $region246: #{elr_loss.1} parent=1 // pred_check
      _
    $region247: #{elr_loss.1} parent=1 // pred_check_branch
      %457 = sbr.rel (%p454) target = $region249
    $region248: #{elr_loss.1} parent=1 // pred_region
      %s472 = sand.u32 1, 7
      %p473 = scmp.eq.s32.totalorder %s472, 0
      %p474 = pneg %p473
      // Predicated region
      $region261: #{elr_loss.1} parent=248 // pred_check
        _
      $region262: #{elr_loss.1} parent=248 // pred_check_branch
        %476 = sbr.rel (%p473) target = $region264
      $region263: #{elr_loss.1} parent=248 // pred_region
        %s477 = sand.u32 1, 7
        %s478 = ssub.s32 1, %s477
        %s479 = scalar_lea.vmem [#allocation2], %s478
        %s480 = ssub.s32 1, %s477
        %s481 = scalar_lea.vmem %s452, %s480
        %s482 = sshllo.u32 0, %s477
        loop: start=0, step=1, limit=1
        $region265: #{elr_loss.1} parent=263 // loop_pre_header
          _
        $region266: #{elr_loss.1} parent=263 // loop_header
          %s484 = sphi 0, %s488
          %p485 = scmp.ge.s32.totalorder %s484, 1
          %s489 = sphi %s479, %s479
          %s490 = sphi %s481, %s481
        $region267: #{elr_loss.1} parent=263 // loop_header_branch
          %487 = sbr.rel (%p485) target = $region271
        $region268: #{elr_loss.1} parent=263 // loop_body
          %v491 = vld [vmem:[%s489] sm:%s482]
          %492 = vst [vmem:[%s490] sm:%s482] %v491
        $region269: #{elr_loss.1} parent=263 // loop_footer
          %s488 = sadd.s32 1, %s484
        $region270: #{elr_loss.1} parent=263 // loop_footer_branch
          %483 = sbr.rel target = $region266
        $region271: #{elr_loss.1} parent=263 // loop_exit
          _
      $region264: #{elr_loss.1} parent=248 // pred_fallthru
        _
    $region249: #{elr_loss.1} parent=1 // pred_fallthru
      _
    // Predicated region
    $region250: #{elr_loss.1} parent=1 // pred_check
      %p458 = pneg %p454
    $region251: #{elr_loss.1} parent=1 // pred_check_branch
      %460 = sbr.rel (%p458) target = $region253
    $region252: #{elr_loss.1} parent=1 // pred_region
      %s461 = sshllo.u32 0, 1
      loop: start=0, step=1, limit=1
      $region254: #{elr_loss.1} parent=252 // loop_pre_header
        _
      $region255: #{elr_loss.1} parent=252 // loop_header
        %s463 = sphi 0, %s467
        %p464 = scmp.ge.s32.totalorder %s463, 1
        %s468 = sphi [#allocation2], [#allocation2]
        %s469 = sphi %s452, %s452
      $region256: #{elr_loss.1} parent=252 // loop_header_branch
        %466 = sbr.rel (%p464) target = $region260
      $region257: #{elr_loss.1} parent=252 // loop_body
        %v470 = vld [vmem:[%s468] sm:%s461]
        %471 = vst [vmem:[%s469] sm:%s461] %v470
      $region258: #{elr_loss.1} parent=252 // loop_footer
        %s467 = sadd.s32 1, %s463
      $region259: #{elr_loss.1} parent=252 // loop_footer_branch
        %462 = sbr.rel target = $region255
      $region260: #{elr_loss.1} parent=252 // loop_exit
        _
    $region253: #{elr_loss.1} parent=1 // pred_fallthru
      _
    // Predicated region
    $region272: #{elr_loss.1} parent=1 // pred_check
      _
    $region273: #{elr_loss.1} parent=1 // pred_check_branch
      %495 = sbr.rel (0) target = $region275
    $region274: #{elr_loss.1} parent=1 // pred_region
      %496 = vsyncadd [#allocation4], 16
    $region275: #{elr_loss.1} parent=1 // pred_fallthru
      _
    %s497 = sld [smem:[#allocation6 + %s66]]
    %s498 = scalar_lea.vmem %s3, %s497
    %s499 = scalar_lea.sflag [#allocation4], 1
    %p501 = scmp.lt.u32.totalorder 1, 8
    %p502 = pneg %p501
    // Predicated region
    $region276: #{elr_loss.1} parent=1 // pred_check
      _
    $region277: #{elr_loss.1} parent=1 // pred_check_branch
      %504 = sbr.rel (%p501) target = $region279
    $region278: #{elr_loss.1} parent=1 // pred_region
      %s519 = sand.u32 1, 7
      %p520 = scmp.eq.s32.totalorder %s519, 0
      %p521 = pneg %p520
      // Predicated region
      $region291: #{elr_loss.1} parent=278 // pred_check
        _
      $region292: #{elr_loss.1} parent=278 // pred_check_branch
        %523 = sbr.rel (%p520) target = $region294
      $region293: #{elr_loss.1} parent=278 // pred_region
        %s524 = sand.u32 1, 7
        %s525 = ssub.s32 1, %s524
        %s526 = scalar_lea.vmem %s69, %s525 [#allocation2]
        %s527 = ssub.s32 1, %s524
        %s528 = scalar_lea.vmem %s498, %s527
        %s529 = sshllo.u32 0, %s524
        loop: start=0, step=1, limit=1
        $region295: #{elr_loss.1} parent=293 // loop_pre_header
          _
        $region296: #{elr_loss.1} parent=293 // loop_header
          %s531 = sphi 0, %s535
          %p532 = scmp.ge.s32.totalorder %s531, 1
          %s536 = sphi %s526, %s526
          %s537 = sphi %s528, %s528
        $region297: #{elr_loss.1} parent=293 // loop_header_branch
          %534 = sbr.rel (%p532) target = $region301
        $region298: #{elr_loss.1} parent=293 // loop_body
          %v538 = vld [vmem:[%s536] sm:%s529]
          %539 = vst [vmem:[%s537] sm:%s529] %v538
        $region299: #{elr_loss.1} parent=293 // loop_footer
          %s535 = sadd.s32 1, %s531
        $region300: #{elr_loss.1} parent=293 // loop_footer_branch
          %530 = sbr.rel target = $region296
        $region301: #{elr_loss.1} parent=293 // loop_exit
          _
      $region294: #{elr_loss.1} parent=278 // pred_fallthru
        _
    $region279: #{elr_loss.1} parent=1 // pred_fallthru
      _
    // Predicated region
    $region280: #{elr_loss.1} parent=1 // pred_check
      %p505 = pneg %p501
    $region281: #{elr_loss.1} parent=1 // pred_check_branch
      %507 = sbr.rel (%p505) target = $region283
    $region282: #{elr_loss.1} parent=1 // pred_region
      %s508 = sshllo.u32 0, 1
      loop: start=0, step=1, limit=1
      $region284: #{elr_loss.1} parent=282 // loop_pre_header
        _
      $region285: #{elr_loss.1} parent=282 // loop_header
        %s510 = sphi 0, %s514
        %p511 = scmp.ge.s32.totalorder %s510, 1
        %s515 = sphi %s69, %s69
        %s516 = sphi %s498, %s498
      $region286: #{elr_loss.1} parent=282 // loop_header_branch
        %513 = sbr.rel (%p511) target = $region290
      $region287: #{elr_loss.1} parent=282 // loop_body
        %v517 = vld [vmem:[%s515] sm:%s508]
        %518 = vst [vmem:[%s516] sm:%s508] %v517
      $region288: #{elr_loss.1} parent=282 // loop_footer
        %s514 = sadd.s32 1, %s510
      $region289: #{elr_loss.1} parent=282 // loop_footer_branch
        %509 = sbr.rel target = $region285
      $region290: #{elr_loss.1} parent=282 // loop_exit
        _
    $region283: #{elr_loss.1} parent=1 // pred_fallthru
      _
    // Predicated region
    $region302: #{elr_loss.1} parent=1 // pred_check
      _
    $region303: #{elr_loss.1} parent=1 // pred_check_branch
      %542 = sbr.rel (0) target = $region305
    $region304: #{elr_loss.1} parent=1 // pred_region
      %543 = vsyncadd %s499, 16
    $region305: #{elr_loss.1} parent=1 // pred_fallthru
      _
    %s544 = sld [smem:[#allocation6 + %s115]]
    %s545 = scalar_lea.vmem %s3, %s544
    %s546 = scalar_lea.sflag [#allocation4], 2
    %p548 = scmp.lt.u32.totalorder 1, 8
    %p549 = pneg %p548
    // Predicated region
    $region306: #{elr_loss.1} parent=1 // pred_check
      _
    $region307: #{elr_loss.1} parent=1 // pred_check_branch
      %551 = sbr.rel (%p548) target = $region309
    $region308: #{elr_loss.1} parent=1 // pred_region
      %s566 = sand.u32 1, 7
      %p567 = scmp.eq.s32.totalorder %s566, 0
      %p568 = pneg %p567
      // Predicated region
      $region321: #{elr_loss.1} parent=308 // pred_check
        _
      $region322: #{elr_loss.1} parent=308 // pred_check_branch
        %570 = sbr.rel (%p567) target = $region324
      $region323: #{elr_loss.1} parent=308 // pred_region
        %s571 = sand.u32 1, 7
        %s572 = ssub.s32 1, %s571
        %s573 = scalar_lea.vmem %s118, %s572 [#allocation2]
        %s574 = ssub.s32 1, %s571
        %s575 = scalar_lea.vmem %s545, %s574
        %s576 = sshllo.u32 0, %s571
        loop: start=0, step=1, limit=1
        $region325: #{elr_loss.1} parent=323 // loop_pre_header
          _
        $region326: #{elr_loss.1} parent=323 // loop_header
          %s578 = sphi 0, %s582
          %p579 = scmp.ge.s32.totalorder %s578, 1
          %s583 = sphi %s573, %s573
          %s584 = sphi %s575, %s575
        $region327: #{elr_loss.1} parent=323 // loop_header_branch
          %581 = sbr.rel (%p579) target = $region331
        $region328: #{elr_loss.1} parent=323 // loop_body
          %v585 = vld [vmem:[%s583] sm:%s576]
          %586 = vst [vmem:[%s584] sm:%s576] %v585
        $region329: #{elr_loss.1} parent=323 // loop_footer
          %s582 = sadd.s32 1, %s578
        $region330: #{elr_loss.1} parent=323 // loop_footer_branch
          %577 = sbr.rel target = $region326
        $region331: #{elr_loss.1} parent=323 // loop_exit
          _
      $region324: #{elr_loss.1} parent=308 // pred_fallthru
        _
    $region309: #{elr_loss.1} parent=1 // pred_fallthru
      _
    // Predicated region
    $region310: #{elr_loss.1} parent=1 // pred_check
      %p552 = pneg %p548
    $region311: #{elr_loss.1} parent=1 // pred_check_branch
      %554 = sbr.rel (%p552) target = $region313
    $region312: #{elr_loss.1} parent=1 // pred_region
      %s555 = sshllo.u32 0, 1
      loop: start=0, step=1, limit=1
      $region314: #{elr_loss.1} parent=312 // loop_pre_header
        _
      $region315: #{elr_loss.1} parent=312 // loop_header
        %s557 = sphi 0, %s561
        %p558 = scmp.ge.s32.totalorder %s557, 1
        %s562 = sphi %s118, %s118
        %s563 = sphi %s545, %s545
      $region316: #{elr_loss.1} parent=312 // loop_header_branch
        %560 = sbr.rel (%p558) target = $region320
      $region317: #{elr_loss.1} parent=312 // loop_body
        %v564 = vld [vmem:[%s562] sm:%s555]
        %565 = vst [vmem:[%s563] sm:%s555] %v564
      $region318: #{elr_loss.1} parent=312 // loop_footer
        %s561 = sadd.s32 1, %s557
      $region319: #{elr_loss.1} parent=312 // loop_footer_branch
        %556 = sbr.rel target = $region315
      $region320: #{elr_loss.1} parent=312 // loop_exit
        _
    $region313: #{elr_loss.1} parent=1 // pred_fallthru
      _
    // Predicated region
    $region332: #{elr_loss.1} parent=1 // pred_check
      _
    $region333: #{elr_loss.1} parent=1 // pred_check_branch
      %589 = sbr.rel (0) target = $region335
    $region334: #{elr_loss.1} parent=1 // pred_region
      %590 = vsyncadd %s546, 16
    $region335: #{elr_loss.1} parent=1 // pred_fallthru
      _
    %s591 = sld [smem:[#allocation6 + %s164]]
    %s592 = scalar_lea.vmem %s3, %s591
    %s593 = scalar_lea.sflag [#allocation4], 3
    %p595 = scmp.lt.u32.totalorder 1, 8
    %p596 = pneg %p595
    // Predicated region
    $region336: #{elr_loss.1} parent=1 // pred_check
      _
    $region337: #{elr_loss.1} parent=1 // pred_check_branch
      %598 = sbr.rel (%p595) target = $region339
    $region338: #{elr_loss.1} parent=1 // pred_region
      %s613 = sand.u32 1, 7
      %p614 = scmp.eq.s32.totalorder %s613, 0
      %p615 = pneg %p614
      // Predicated region
      $region351: #{elr_loss.1} parent=338 // pred_check
        _
      $region352: #{elr_loss.1} parent=338 // pred_check_branch
        %617 = sbr.rel (%p614) target = $region354
      $region353: #{elr_loss.1} parent=338 // pred_region
        %s618 = sand.u32 1, 7
        %s619 = ssub.s32 1, %s618
        %s620 = scalar_lea.vmem %s167, %s619 [#allocation2]
        %s621 = ssub.s32 1, %s618
        %s622 = scalar_lea.vmem %s592, %s621
        %s623 = sshllo.u32 0, %s618
        loop: start=0, step=1, limit=1
        $region355: #{elr_loss.1} parent=353 // loop_pre_header
          _
        $region356: #{elr_loss.1} parent=353 // loop_header
          %s625 = sphi 0, %s629
          %p626 = scmp.ge.s32.totalorder %s625, 1
          %s630 = sphi %s620, %s620
          %s631 = sphi %s622, %s622
        $region357: #{elr_loss.1} parent=353 // loop_header_branch
          %628 = sbr.rel (%p626) target = $region361
        $region358: #{elr_loss.1} parent=353 // loop_body
          %v632 = vld [vmem:[%s630] sm:%s623]
          %633 = vst [vmem:[%s631] sm:%s623] %v632
        $region359: #{elr_loss.1} parent=353 // loop_footer
          %s629 = sadd.s32 1, %s625
        $region360: #{elr_loss.1} parent=353 // loop_footer_branch
          %624 = sbr.rel target = $region356
        $region361: #{elr_loss.1} parent=353 // loop_exit
          _
      $region354: #{elr_loss.1} parent=338 // pred_fallthru
        _
    $region339: #{elr_loss.1} parent=1 // pred_fallthru
      _
    // Predicated region
    $region340: #{elr_loss.1} parent=1 // pred_check
      %p599 = pneg %p595
    $region341: #{elr_loss.1} parent=1 // pred_check_branch
      %601 = sbr.rel (%p599) target = $region343
    $region342: #{elr_loss.1} parent=1 // pred_region
      %s602 = sshllo.u32 0, 1
      loop: start=0, step=1, limit=1
      $region344: #{elr_loss.1} parent=342 // loop_pre_header
        _
      $region345: #{elr_loss.1} parent=342 // loop_header
        %s604 = sphi 0, %s608
        %p605 = scmp.ge.s32.totalorder %s604, 1
        %s609 = sphi %s167, %s167
        %s610 = sphi %s592, %s592
      $region346: #{elr_loss.1} parent=342 // loop_header_branch
        %607 = sbr.rel (%p605) target = $region350
      $region347: #{elr_loss.1} parent=342 // loop_body
        %v611 = vld [vmem:[%s609] sm:%s602]
        %612 = vst [vmem:[%s610] sm:%s602] %v611
      $region348: #{elr_loss.1} parent=342 // loop_footer
        %s608 = sadd.s32 1, %s604
      $region349: #{elr_loss.1} parent=342 // loop_footer_branch
        %603 = sbr.rel target = $region345
      $region350: #{elr_loss.1} parent=342 // loop_exit
        _
    $region343: #{elr_loss.1} parent=1 // pred_fallthru
      _
    // Predicated region
    $region362: #{elr_loss.1} parent=1 // pred_check
      _
    $region363: #{elr_loss.1} parent=1 // pred_check_branch
      %636 = sbr.rel (0) target = $region365
    $region364: #{elr_loss.1} parent=1 // pred_region
      %637 = vsyncadd %s593, 16
    $region365: #{elr_loss.1} parent=1 // pred_fallthru
      _
    %s638 = sld [smem:[#allocation6 + %s213]]
    %s639 = scalar_lea.vmem %s3, %s638
    %s640 = scalar_lea.sflag [#allocation4], 4
    %p642 = scmp.lt.u32.totalorder 1, 8
    %p643 = pneg %p642
    // Predicated region
    $region366: #{elr_loss.1} parent=1 // pred_check
      _
    $region367: #{elr_loss.1} parent=1 // pred_check_branch
      %645 = sbr.rel (%p642) target = $region369
    $region368: #{elr_loss.1} parent=1 // pred_region
      %s660 = sand.u32 1, 7
      %p661 = scmp.eq.s32.totalorder %s660, 0
      %p662 = pneg %p661
      // Predicated region
      $region381: #{elr_loss.1} parent=368 // pred_check
        _
      $region382: #{elr_loss.1} parent=368 // pred_check_branch
        %664 = sbr.rel (%p661) target = $region384
      $region383: #{elr_loss.1} parent=368 // pred_region
        %s665 = sand.u32 1, 7
        %s666 = ssub.s32 1, %s665
        %s667 = scalar_lea.vmem %s216, %s666 [#allocation2]
        %s668 = ssub.s32 1, %s665
        %s669 = scalar_lea.vmem %s639, %s668
        %s670 = sshllo.u32 0, %s665
        loop: start=0, step=1, limit=1
        $region385: #{elr_loss.1} parent=383 // loop_pre_header
          _
        $region386: #{elr_loss.1} parent=383 // loop_header
          %s672 = sphi 0, %s676
          %p673 = scmp.ge.s32.totalorder %s672, 1
          %s677 = sphi %s667, %s667
          %s678 = sphi %s669, %s669
        $region387: #{elr_loss.1} parent=383 // loop_header_branch
          %675 = sbr.rel (%p673) target = $region391
        $region388: #{elr_loss.1} parent=383 // loop_body
          %v679 = vld [vmem:[%s677] sm:%s670]
          %680 = vst [vmem:[%s678] sm:%s670] %v679
        $region389: #{elr_loss.1} parent=383 // loop_footer
          %s676 = sadd.s32 1, %s672
        $region390: #{elr_loss.1} parent=383 // loop_footer_branch
          %671 = sbr.rel target = $region386
        $region391: #{elr_loss.1} parent=383 // loop_exit
          _
      $region384: #{elr_loss.1} parent=368 // pred_fallthru
        _
    $region369: #{elr_loss.1} parent=1 // pred_fallthru
      _
    // Predicated region
    $region370: #{elr_loss.1} parent=1 // pred_check
      %p646 = pneg %p642
    $region371: #{elr_loss.1} parent=1 // pred_check_branch
      %648 = sbr.rel (%p646) target = $region373
    $region372: #{elr_loss.1} parent=1 // pred_region
      %s649 = sshllo.u32 0, 1
      loop: start=0, step=1, limit=1
      $region374: #{elr_loss.1} parent=372 // loop_pre_header
        _
      $region375: #{elr_loss.1} parent=372 // loop_header
        %s651 = sphi 0, %s655
        %p652 = scmp.ge.s32.totalorder %s651, 1
        %s656 = sphi %s216, %s216
        %s657 = sphi %s639, %s639
      $region376: #{elr_loss.1} parent=372 // loop_header_branch
        %654 = sbr.rel (%p652) target = $region380
      $region377: #{elr_loss.1} parent=372 // loop_body
        %v658 = vld [vmem:[%s656] sm:%s649]
        %659 = vst [vmem:[%s657] sm:%s649] %v658
      $region378: #{elr_loss.1} parent=372 // loop_footer
        %s655 = sadd.s32 1, %s651
      $region379: #{elr_loss.1} parent=372 // loop_footer_branch
        %650 = sbr.rel target = $region375
      $region380: #{elr_loss.1} parent=372 // loop_exit
        _
    $region373: #{elr_loss.1} parent=1 // pred_fallthru
      _
    // Predicated region
    $region392: #{elr_loss.1} parent=1 // pred_check
      _
    $region393: #{elr_loss.1} parent=1 // pred_check_branch
      %683 = sbr.rel (0) target = $region395
    $region394: #{elr_loss.1} parent=1 // pred_region
      %684 = vsyncadd %s640, 16
    $region395: #{elr_loss.1} parent=1 // pred_fallthru
      _
    %s685 = sld [smem:[#allocation6 + %s262]]
    %s686 = scalar_lea.vmem %s3, %s685
    %s687 = scalar_lea.sflag [#allocation4], 5
    %p689 = scmp.lt.u32.totalorder 1, 8
    %p690 = pneg %p689
    // Predicated region
    $region396: #{elr_loss.1} parent=1 // pred_check
      _
    $region397: #{elr_loss.1} parent=1 // pred_check_branch
      %692 = sbr.rel (%p689) target = $region399
    $region398: #{elr_loss.1} parent=1 // pred_region
      %s707 = sand.u32 1, 7
      %p708 = scmp.eq.s32.totalorder %s707, 0
      %p709 = pneg %p708
      // Predicated region
      $region411: #{elr_loss.1} parent=398 // pred_check
        _
      $region412: #{elr_loss.1} parent=398 // pred_check_branch
        %711 = sbr.rel (%p708) target = $region414
      $region413: #{elr_loss.1} parent=398 // pred_region
        %s712 = sand.u32 1, 7
        %s713 = ssub.s32 1, %s712
        %s714 = scalar_lea.vmem %s265, %s713 [#allocation2]
        %s715 = ssub.s32 1, %s712
        %s716 = scalar_lea.vmem %s686, %s715
        %s717 = sshllo.u32 0, %s712
        loop: start=0, step=1, limit=1
        $region415: #{elr_loss.1} parent=413 // loop_pre_header
          _
        $region416: #{elr_loss.1} parent=413 // loop_header
          %s719 = sphi 0, %s723
          %p720 = scmp.ge.s32.totalorder %s719, 1
          %s724 = sphi %s714, %s714
          %s725 = sphi %s716, %s716
        $region417: #{elr_loss.1} parent=413 // loop_header_branch
          %722 = sbr.rel (%p720) target = $region421
        $region418: #{elr_loss.1} parent=413 // loop_body
          %v726 = vld [vmem:[%s724] sm:%s717]
          %727 = vst [vmem:[%s725] sm:%s717] %v726
        $region419: #{elr_loss.1} parent=413 // loop_footer
          %s723 = sadd.s32 1, %s719
        $region420: #{elr_loss.1} parent=413 // loop_footer_branch
          %718 = sbr.rel target = $region416
        $region421: #{elr_loss.1} parent=413 // loop_exit
          _
      $region414: #{elr_loss.1} parent=398 // pred_fallthru
        _
    $region399: #{elr_loss.1} parent=1 // pred_fallthru
      _
    // Predicated region
    $region400: #{elr_loss.1} parent=1 // pred_check
      %p693 = pneg %p689
    $region401: #{elr_loss.1} parent=1 // pred_check_branch
      %695 = sbr.rel (%p693) target = $region403
    $region402: #{elr_loss.1} parent=1 // pred_region
      %s696 = sshllo.u32 0, 1
      loop: start=0, step=1, limit=1
      $region404: #{elr_loss.1} parent=402 // loop_pre_header
        _
      $region405: #{elr_loss.1} parent=402 // loop_header
        %s698 = sphi 0, %s702
        %p699 = scmp.ge.s32.totalorder %s698, 1
        %s703 = sphi %s265, %s265
        %s704 = sphi %s686, %s686
      $region406: #{elr_loss.1} parent=402 // loop_header_branch
        %701 = sbr.rel (%p699) target = $region410
      $region407: #{elr_loss.1} parent=402 // loop_body
        %v705 = vld [vmem:[%s703] sm:%s696]
        %706 = vst [vmem:[%s704] sm:%s696] %v705
      $region408: #{elr_loss.1} parent=402 // loop_footer
        %s702 = sadd.s32 1, %s698
      $region409: #{elr_loss.1} parent=402 // loop_footer_branch
        %697 = sbr.rel target = $region405
      $region410: #{elr_loss.1} parent=402 // loop_exit
        _
    $region403: #{elr_loss.1} parent=1 // pred_fallthru
      _
    // Predicated region
    $region422: #{elr_loss.1} parent=1 // pred_check
      _
    $region423: #{elr_loss.1} parent=1 // pred_check_branch
      %730 = sbr.rel (0) target = $region425
    $region424: #{elr_loss.1} parent=1 // pred_region
      %731 = vsyncadd %s687, 16
    $region425: #{elr_loss.1} parent=1 // pred_fallthru
      _
    %s732 = sld [smem:[#allocation6 + %s311]]
    %s733 = scalar_lea.vmem %s3, %s732
    %s734 = scalar_lea.sflag [#allocation4], 6
    %p736 = scmp.lt.u32.totalorder 1, 8
    %p737 = pneg %p736
    // Predicated region
    $region426: #{elr_loss.1} parent=1 // pred_check
      _
    $region427: #{elr_loss.1} parent=1 // pred_check_branch
      %739 = sbr.rel (%p736) target = $region429
    $region428: #{elr_loss.1} parent=1 // pred_region
      %s754 = sand.u32 1, 7
      %p755 = scmp.eq.s32.totalorder %s754, 0
      %p756 = pneg %p755
      // Predicated region
      $region441: #{elr_loss.1} parent=428 // pred_check
        _
      $region442: #{elr_loss.1} parent=428 // pred_check_branch
        %758 = sbr.rel (%p755) target = $region444
      $region443: #{elr_loss.1} parent=428 // pred_region
        %s759 = sand.u32 1, 7
        %s760 = ssub.s32 1, %s759
        %s761 = scalar_lea.vmem %s314, %s760 [#allocation2]
        %s762 = ssub.s32 1, %s759
        %s763 = scalar_lea.vmem %s733, %s762
        %s764 = sshllo.u32 0, %s759
        loop: start=0, step=1, limit=1
        $region445: #{elr_loss.1} parent=443 // loop_pre_header
          _
        $region446: #{elr_loss.1} parent=443 // loop_header
          %s766 = sphi 0, %s770
          %p767 = scmp.ge.s32.totalorder %s766, 1
          %s771 = sphi %s761, %s761
          %s772 = sphi %s763, %s763
        $region447: #{elr_loss.1} parent=443 // loop_header_branch
          %769 = sbr.rel (%p767) target = $region451
        $region448: #{elr_loss.1} parent=443 // loop_body
          %v773 = vld [vmem:[%s771] sm:%s764]
          %774 = vst [vmem:[%s772] sm:%s764] %v773
        $region449: #{elr_loss.1} parent=443 // loop_footer
          %s770 = sadd.s32 1, %s766
        $region450: #{elr_loss.1} parent=443 // loop_footer_branch
          %765 = sbr.rel target = $region446
        $region451: #{elr_loss.1} parent=443 // loop_exit
          _
      $region444: #{elr_loss.1} parent=428 // pred_fallthru
        _
    $region429: #{elr_loss.1} parent=1 // pred_fallthru
      _
    // Predicated region
    $region430: #{elr_loss.1} parent=1 // pred_check
      %p740 = pneg %p736
    $region431: #{elr_loss.1} parent=1 // pred_check_branch
      %742 = sbr.rel (%p740) target = $region433
    $region432: #{elr_loss.1} parent=1 // pred_region
      %s743 = sshllo.u32 0, 1
      loop: start=0, step=1, limit=1
      $region434: #{elr_loss.1} parent=432 // loop_pre_header
        _
      $region435: #{elr_loss.1} parent=432 // loop_header
        %s745 = sphi 0, %s749
        %p746 = scmp.ge.s32.totalorder %s745, 1
        %s750 = sphi %s314, %s314
        %s751 = sphi %s733, %s733
      $region436: #{elr_loss.1} parent=432 // loop_header_branch
        %748 = sbr.rel (%p746) target = $region440
      $region437: #{elr_loss.1} parent=432 // loop_body
        %v752 = vld [vmem:[%s750] sm:%s743]
        %753 = vst [vmem:[%s751] sm:%s743] %v752
      $region438: #{elr_loss.1} parent=432 // loop_footer
        %s749 = sadd.s32 1, %s745
      $region439: #{elr_loss.1} parent=432 // loop_footer_branch
        %744 = sbr.rel target = $region435
      $region440: #{elr_loss.1} parent=432 // loop_exit
        _
    $region433: #{elr_loss.1} parent=1 // pred_fallthru
      _
    // Predicated region
    $region452: #{elr_loss.1} parent=1 // pred_check
      _
    $region453: #{elr_loss.1} parent=1 // pred_check_branch
      %777 = sbr.rel (0) target = $region455
    $region454: #{elr_loss.1} parent=1 // pred_region
      %778 = vsyncadd %s734, 16
    $region455: #{elr_loss.1} parent=1 // pred_fallthru
      _
    %s779 = sld [smem:[#allocation6 + %s360]]
    %s780 = scalar_lea.vmem %s3, %s779
    %s781 = scalar_lea.sflag [#allocation4], 7
    %p783 = scmp.lt.u32.totalorder 1, 8
    %p784 = pneg %p783
    // Predicated region
    $region456: #{elr_loss.1} parent=1 // pred_check
      _
    $region457: #{elr_loss.1} parent=1 // pred_check_branch
      %786 = sbr.rel (%p783) target = $region459
    $region458: #{elr_loss.1} parent=1 // pred_region
      %s801 = sand.u32 1, 7
      %p802 = scmp.eq.s32.totalorder %s801, 0
      %p803 = pneg %p802
      // Predicated region
      $region471: #{elr_loss.1} parent=458 // pred_check
        _
      $region472: #{elr_loss.1} parent=458 // pred_check_branch
        %805 = sbr.rel (%p802) target = $region474
      $region473: #{elr_loss.1} parent=458 // pred_region
        %s806 = sand.u32 1, 7
        %s807 = ssub.s32 1, %s806
        %s808 = scalar_lea.vmem %s363, %s807 [#allocation2]
        %s809 = ssub.s32 1, %s806
        %s810 = scalar_lea.vmem %s780, %s809
        %s811 = sshllo.u32 0, %s806
        loop: start=0, step=1, limit=1
        $region475: #{elr_loss.1} parent=473 // loop_pre_header
          _
        $region476: #{elr_loss.1} parent=473 // loop_header
          %s813 = sphi 0, %s817
          %p814 = scmp.ge.s32.totalorder %s813, 1
          %s818 = sphi %s808, %s808
          %s819 = sphi %s810, %s810
        $region477: #{elr_loss.1} parent=473 // loop_header_branch
          %816 = sbr.rel (%p814) target = $region481
        $region478: #{elr_loss.1} parent=473 // loop_body
          %v820 = vld [vmem:[%s818] sm:%s811]
          %821 = vst [vmem:[%s819] sm:%s811] %v820
        $region479: #{elr_loss.1} parent=473 // loop_footer
          %s817 = sadd.s32 1, %s813
        $region480: #{elr_loss.1} parent=473 // loop_footer_branch
          %812 = sbr.rel target = $region476
        $region481: #{elr_loss.1} parent=473 // loop_exit
          _
      $region474: #{elr_loss.1} parent=458 // pred_fallthru
        _
    $region459: #{elr_loss.1} parent=1 // pred_fallthru
      _
    // Predicated region
    $region460: #{elr_loss.1} parent=1 // pred_check
      %p787 = pneg %p783
    $region461: #{elr_loss.1} parent=1 // pred_check_branch
      %789 = sbr.rel (%p787) target = $region463
    $region462: #{elr_loss.1} parent=1 // pred_region
      %s790 = sshllo.u32 0, 1
      loop: start=0, step=1, limit=1
      $region464: #{elr_loss.1} parent=462 // loop_pre_header
        _
      $region465: #{elr_loss.1} parent=462 // loop_header
        %s792 = sphi 0, %s796
        %p793 = scmp.ge.s32.totalorder %s792, 1
        %s797 = sphi %s363, %s363
        %s798 = sphi %s780, %s780
      $region466: #{elr_loss.1} parent=462 // loop_header_branch
        %795 = sbr.rel (%p793) target = $region470
      $region467: #{elr_loss.1} parent=462 // loop_body
        %v799 = vld [vmem:[%s797] sm:%s790]
        %800 = vst [vmem:[%s798] sm:%s790] %v799
      $region468: #{elr_loss.1} parent=462 // loop_footer
        %s796 = sadd.s32 1, %s792
      $region469: #{elr_loss.1} parent=462 // loop_footer_branch
        %791 = sbr.rel target = $region465
      $region470: #{elr_loss.1} parent=462 // loop_exit
        _
    $region463: #{elr_loss.1} parent=1 // pred_fallthru
      _
    // Predicated region
    $region482: #{elr_loss.1} parent=1 // pred_check
      _
    $region483: #{elr_loss.1} parent=1 // pred_check_branch
      %824 = sbr.rel (0) target = $region485
    $region484: #{elr_loss.1} parent=1 // pred_region
      %825 = vsyncadd %s781, 16
    $region485: #{elr_loss.1} parent=1 // pred_fallthru
      _
    %v826 = vmul.f32 %v449, %v423
    %v827 = vsel %vm410, %v826, 0.0
    %828 = vadd.xlane.f32.xlu0 %v827
    %v829 = vpop.xlane.xlu0 %828
    %v830 = vsub.f32 1.0, %v829
    %v831 = vlog2.pop %v830
    %v832 = vmul.f32 %v831, 0.6931472
    %v833 = vrot.slane %v832, 4
    %v834 = vadd.f32 %v832, %v833
    %v835 = vrot.slane %v834, 2
    %v836 = vadd.f32 %v834, %v835
    %v837 = vrot.slane %v836, 1
    %v838 = vadd.f32 %v836, %v837
    %v839 = vmul.f32 %v838, 0.375
    %840 = vst [vmem:[#allocation7] sm:$0x1] %v839
    %s841 = sshll.u32 %s429, 4
    %842 = dma.done [#allocation4], %s841
    %s843 = sshll.u32 %s429, 4
    %844 = dma.done %s499, %s843
    %s845 = sshll.u32 %s429, 4
    %846 = dma.done %s546, %s845
    %s847 = sshll.u32 %s429, 4
    %848 = dma.done %s593, %s847
    %s849 = sshll.u32 %s429, 4
    %850 = dma.done %s640, %s849
    %s851 = sshll.u32 %s429, 4
    %852 = dma.done %s687, %s851
    %s853 = sshll.u32 %s429, 4
    %854 = dma.done %s734, %s853
    %s855 = sshll.u32 %s429, 4
    %856 = dma.done %s781, %s855
    // Predicated region
    $region486: #{elr_loss.1} parent=1 // pred_check
      _
    $region487: #{elr_loss.1} parent=1 // pred_check_branch
      %858 = sbr.rel (0) target = $region489
    $region488: #{elr_loss.1} parent=1 // pred_region
      %s860 = ssub.s32 16, 16
      %861 = vsyncadd [#allocation8], %s860
      %s863 = sshll.u32 [#allocation7], 4
      %s864 = int_to_ptr.vmem [resolvable:$true] %s863
      %866 = dma.vmem_to_hbm [thread:$0]  %s864, 16, %s4, [#allocation8]
    $region489: #{elr_loss.1} parent=1 // pred_fallthru
      _
    // Predicated region
    $region490: #{elr_loss.1} parent=1 // pred_check
      _
    $region491: #{elr_loss.1} parent=1 // pred_check_branch
      %868 = sbr.rel (0) target = $region493
    $region492: #{elr_loss.1} parent=1 // pred_region
      %869 = dma.done [#allocation8], 16
    $region493: #{elr_loss.1} parent=1 // pred_fallthru
      _
    %870 = vsyncpa [#allocation8], 1
  %871 = vsyncmov [#allocation3]
  %s872 = vpop.sfrf %871
  %p873 = scmp.eq.s32.totalorder %s872, 0
  %p874 = pneg %p873
  %876 = shalt.err (%p874)
  %s877 = scalar_lea.sflag [#allocation3], 1
  %878 = vsyncmov %s877
  %s879 = vpop.sfrf %878
  %p880 = scmp.eq.s32.totalorder %s879, 0
  %p881 = pneg %p880
  %883 = shalt.err (%p881)
  %s884 = scalar_lea.sflag [#allocation3], 2
  %885 = vsyncmov %s884
  %s886 = vpop.sfrf %885
  %p887 = scmp.eq.s32.totalorder %s886, 0
  %p888 = pneg %p887
  %890 = shalt.err (%p888)
  %s891 = scalar_lea.sflag [#allocation3], 3
  %892 = vsyncmov %s891
  %s893 = vpop.sfrf %892
  %p894 = scmp.eq.s32.totalorder %s893, 0
  %p895 = pneg %p894
  %897 = shalt.err (%p895)
  %s898 = scalar_lea.sflag [#allocation3], 4
  %899 = vsyncmov %s898
  %s900 = vpop.sfrf %899
  %p901 = scmp.eq.s32.totalorder %s900, 0
  %p902 = pneg %p901
  %904 = shalt.err (%p902)
  %s905 = scalar_lea.sflag [#allocation3], 5
  %906 = vsyncmov %s905
  %s907 = vpop.sfrf %906
  %p908 = scmp.eq.s32.totalorder %s907, 0
  %p909 = pneg %p908
  %911 = shalt.err (%p909)
  %s912 = scalar_lea.sflag [#allocation3], 6
  %913 = vsyncmov %s912
  %s914 = vpop.sfrf %913
  %p915 = scmp.eq.s32.totalorder %s914, 0
  %p916 = pneg %p915
  %918 = shalt.err (%p916)
  %s919 = scalar_lea.sflag [#allocation3], 7
  %920 = vsyncmov %s919
  %s921 = vpop.sfrf %920
  %p922 = scmp.eq.s32.totalorder %s921, 0
  %p923 = pneg %p922
  %925 = shalt.err (%p923)
  %926 = vsyncmov [#allocation4]
  %s927 = vpop.sfrf %926
  %p928 = scmp.eq.s32.totalorder %s927, 0
  %p929 = pneg %p928
  %931 = shalt.err (%p929)
  %s932 = scalar_lea.sflag [#allocation4], 1
  %933 = vsyncmov %s932
  %s934 = vpop.sfrf %933
  %p935 = scmp.eq.s32.totalorder %s934, 0
  %p936 = pneg %p935
  %938 = shalt.err (%p936)
  %s939 = scalar_lea.sflag [#allocation4], 2
  %940 = vsyncmov %s939
  %s941 = vpop.sfrf %940
  %p942 = scmp.eq.s32.totalorder %s941, 0
  %p943 = pneg %p942
  %945 = shalt.err (%p943)
  %s946 = scalar_lea.sflag [#allocation4], 3
  %947 = vsyncmov %s946
  %s948 = vpop.sfrf %947
  %p949 = scmp.eq.s32.totalorder %s948, 0
  %p950 = pneg %p949
  %952 = shalt.err (%p950)
  %s953 = scalar_lea.sflag [#allocation4], 4
  %954 = vsyncmov %s953
  %s955 = vpop.sfrf %954
  %p956 = scmp.eq.s32.totalorder %s955, 0
  %p957 = pneg %p956
  %959 = shalt.err (%p957)
  %s960 = scalar_lea.sflag [#allocation4], 5
  %961 = vsyncmov %s960
  %s962 = vpop.sfrf %961
  %p963 = scmp.eq.s32.totalorder %s962, 0
  %p964 = pneg %p963
  %966 = shalt.err (%p964)
  %s967 = scalar_lea.sflag [#allocation4], 6
  %968 = vsyncmov %s967
  %s969 = vpop.sfrf %968
  %p970 = scmp.eq.s32.totalorder %s969, 0
  %p971 = pneg %p970
  %973 = shalt.err (%p971)
  %s974 = scalar_lea.sflag [#allocation4], 7
  %975 = vsyncmov %s974
  %s976 = vpop.sfrf %975
  %p977 = scmp.eq.s32.totalorder %s976, 0
  %p978 = pneg %p977
  %980 = shalt.err (%p978)

</llo_original>
